<compile_context>
chip_gen: v5e
topology: v5e:2x2
jax: 0.10.0
libtpu: 0.0.40
codegen_flags: <defaults>
</compile_context>

<pallas_src>
import math

import jax
import jax.numpy as jnp
import numpy as np
from jax.experimental import pallas as pl
from jax.experimental.pallas import tpu as pltpu

LEAKY_SLOPE = 0.01   # torch.nn.LeakyReLU default negative_slope
BN_EPS = 1e-5        # torch.nn.BatchNorm1d default eps
LANE = 128
_BF16 = jnp.bfloat16


def _vmem_spec():
    return pl.BlockSpec(memory_space=pltpu.MemorySpace.VMEM)


def _smem_spec():
    return pl.BlockSpec(memory_space=pltpu.MemorySpace.SMEM)


def _any_spec():
    return pl.BlockSpec(memory_space=pl.ANY)


def _round_up(v, m):
    return -(-v // m) * m


def _pad2(a, rows, cols):
    return jnp.pad(a, ((0, rows - a.shape[0]), (0, cols - a.shape[1])))


def _nbytes(a):
    return math.prod(a.shape) * jnp.dtype(a.dtype).itemsize


def _vmem_capacity_bytes():
    # Generation-aware physical VMEM (128 MiB on v5e/v6e, 64 MiB on v7x).
    try:
        return int(pltpu.get_tpu_info().vmem_capacity_bytes)
    except Exception:
        return 64 << 20          # conservative fallback (v7x size)


# ---------------------------------------------------------------------------
# Wrapper: pad/pack operands, one pallas_call, slice the padded output.
# ---------------------------------------------------------------------------
def gin_model_forward(x, A, P, layer_params, head_params):
    N, cin = x.shape
    G = P.shape[0]
    hidden = layer_params[0]["w2"].shape[1]
    out_channels = head_params["w2"].shape[1]
    L = len(layer_params)

    # Per-matmul padded dims (review item: don't contract/emit over max(Cp)).
    # NOTE(v6e/v7x): if `hidden` grows past 128, consider rounding these to 256
    # so matmul outputs fill the 256-wide MXU; at these sizes 128 is optimal.
    Cx_p = _round_up(max(cin, hidden), LANE)    # activation width (x across layers)
    C2h_p = _round_up(2 * hidden, LANE)         # MLP expansion width
    Ch_p = _round_up(hidden, LANE)              # head hidden width
    Co_p = _round_up(out_channels, LANE)        # output width
    Np = _round_up(N, LANE)
    Gp = _round_up(G, 8)

    # Row-tile size for streaming A into VMEM (overlaps DMA with layer-0 agg).
    TA = 256 if Np % 256 == 0 else 128
    n_tiles = Np // TA

    # --- pad + pack operands (padding is exact zeros; padded A/P columns are
    #     zero so any bias that leaks into padded node rows never reaches real
    #     rows / pooled graphs) ---
    x_pad = _pad2(x, Np, Cx_p)                                # f32 activations
    a_pad = _pad2(A, Np, Np).astype(_BF16)                    # edge counts: exact in bf16
    p_pad = _pad2(P, Gp, Np).astype(_BF16)                    # one-hot: exact in bf16

    one_plus_eps = jnp.stack(
        [1.0 + lp["eps"][0] for lp in layer_params]).astype(jnp.float32)

    # Linear bias folded into the (eval-mode) BatchNorm shift: (h+b)*s+t = h*s + (b*s+t)
    W1 = jnp.stack([_pad2(lp["w1"], Cx_p, C2h_p) for lp in layer_params]).astype(_BF16)
    S1 = jnp.stack([_pad2(lp["s1"], 1, C2h_p) for lp in layer_params])
    T1 = jnp.stack([_pad2(lp["b1"] * lp["s1"] + lp["t1"], 1, C2h_p)
                    for lp in layer_params])
    W2 = jnp.stack([_pad2(lp["w2"], C2h_p, Cx_p) for lp in layer_params]).astype(_BF16)
    S2 = jnp.stack([_pad2(lp["s2"], 1, Cx_p) for lp in layer_params])
    T2 = jnp.stack([_pad2(lp["b2"] * lp["s2"] + lp["t2"], 1, Cx_p)
                    for lp in layer_params])

    HW1 = _pad2(head_params["w1"], Cx_p, Ch_p).astype(_BF16)
    HS = _pad2(head_params["s"], 1, Ch_p)
    HT = _pad2(head_params["b1"] * head_params["s"] + head_params["t"], 1, Ch_p)
    HW2 = _pad2(head_params["w2"], Ch_p, Co_p).astype(_BF16)
    HB2 = _pad2(head_params["b2"], 1, Co_p)

    vmem_operands = (x_pad, p_pad, W1, S1, T1, W2, S2, T2, HW1, HS, HT, HW2, HB2)
    operands = (one_plus_eps, x_pad, p_pad, a_pad) + vmem_operands[2:]

    # --- VMEM budget (review item: explicit vmem_limit_bytes, generation-aware guard)
    vmem_cap = _vmem_capacity_bytes()
    a_bytes = Np * Np * 2                              # a_vmem scratch (bf16)
    scratch_bytes = a_bytes + Np * Cx_p * 4            # + agg scratch (f32)
    operand_bytes = sum(_nbytes(o) for o in vmem_operands)
    tmp_bytes = 6 * Np * max(Cx_p, C2h_p) * 4          # live f32/bf16 temporaries
    out_bytes = Gp * Co_p * 4
    footprint = scratch_bytes + 2 * operand_bytes + tmp_bytes + out_bytes
    if footprint > int(0.9 * vmem_cap):
        # TODO(synk): tiled per-layer fallback (dst_tile, src_tile) grid with
        # double-buffered A tiles + f32 accumulator and ("parallel","arbitrary")
        # dimension_semantics for adjacencies that don't fit in VMEM.
        raise NotImplementedError("fused kernel requires a VMEM-resident adjacency")
    vmem_limit = int(min(vmem_cap, max(footprint + (8 << 20), 32 << 20)))

    # -----------------------------------------------------------------------
    # Fused kernel body (closure over L / TA / n_tiles, all static).
    # -----------------------------------------------------------------------
    def kernel(eps_ref,                                   # SMEM (L,) = 1+eps_l
               x_ref, p_ref, a_hbm,                       # VMEM, VMEM, ANY(HBM)
               w1_ref, s1_ref, t1_ref, w2_ref, s2_ref, t2_ref,
               hw1_ref, hs_ref, ht_ref, hw2_ref, hb2_ref,
               o_ref,
               a_vmem, agg_ref, dma_sems):
        # Issue all row-tile copies of A up front; destinations are disjoint
        # slices of the persistent a_vmem scratch, so they can all be in flight
        # while layer 0 consumes them tile by tile.
        copies = []
        for t in range(n_tiles):
            cp = pltpu.make_async_copy(a_hbm.at[pl.ds(t * TA, TA), :],
                                       a_vmem.at[pl.ds(t * TA, TA), :],
                                       dma_sems.at[t])
            cp.start()
            copies.append(cp)

        x = x_ref[...]                        # (Np, Cx_p) f32, VMEM-resident

        # TODO(synk): for large num_layers switch this static unroll to
        # lax.fori_loop with dynamic w1_ref[l] indexing to bound live ranges.
        for l in range(L):                    # statically unrolled (small L)
            xb = x.astype(_BF16)
            if l == 0:
                # Overlap the A DMA with layer-0 neighbor aggregation: each row
                # block is computed as soon as its tile lands.
                for t in range(n_tiles):
                    copies[t].wait()
                    agg_ref[t * TA:(t + 1) * TA, :] = jnp.dot(
                        a_vmem[t * TA:(t + 1) * TA, :], xb,
                        preferred_element_type=jnp.float32)
                agg = agg_ref[...]
            else:
                # A is fully resident now; one big MXU matmul.
                agg = jnp.dot(a_vmem[...], xb, preferred_element_type=jnp.float32)

            h = eps_ref[l] * x + agg          # eps_ref holds (1 + eps_l)
            # MLP: Linear -> BN(eval, bias folded into shift) -> LeakyReLU -> Linear
            h = jnp.dot(h.astype(_BF16), w1_ref[l],
                        preferred_element_type=jnp.float32)
            h = h * s1_ref[l] + t1_ref[l]
            h = jnp.where(h > 0, h, LEAKY_SLOPE * h)
            h = jnp.dot(h.astype(_BF16), w2_ref[l],
                        preferred_element_type=jnp.float32)
            # outer BatchNorm (folded, bias folded into shift) + ReLU
            x = jnp.maximum(h * s2_ref[l] + t2_ref[l], 0.0)

        # global_add_pool folded in: P is (Gp, Np) one-hot; pooled while x is hot.
        pooled = jnp.dot(p_ref[...], x.astype(_BF16),
                         preferred_element_type=jnp.float32)
        # head: lin1 -> BN(folded) -> relu -> (dropout = identity in eval) -> lin2
        h = jnp.dot(pooled.astype(_BF16), hw1_ref[...],
                    preferred_element_type=jnp.float32)
        h = jnp.maximum(h * hs_ref[...] + ht_ref[...], 0.0)
        o_ref[...] = jnp.dot(h.astype(_BF16), hw2_ref[...],
                             preferred_element_type=jnp.float32) + hb2_ref[...]

    # advisory cost estimate so XLA schedules around the fused custom call
    flops = (L * (2 * Np * Np * Cx_p + 2 * Np * Cx_p * C2h_p + 2 * Np * C2h_p * Cx_p)
             + 2 * Gp * Np * Cx_p + 2 * Gp * Cx_p * Ch_p + 2 * Gp * Ch_p * Co_p)
    bytes_accessed = sum(_nbytes(o) for o in operands) + out_bytes
    cost = pl.CostEstimate(flops=int(flops), transcendentals=0,
                           bytes_accessed=int(bytes_accessed))

    out_pad = pl.pallas_call(
        kernel,
        out_shape=jax.ShapeDtypeStruct((Gp, Co_p), jnp.float32),   # lane-dense output
        in_specs=[_smem_spec(), _vmem_spec(), _vmem_spec(), _any_spec()]
                 + [_vmem_spec()] * (len(operands) - 4),
        out_specs=_vmem_spec(),
        scratch_shapes=[
            pltpu.VMEM((Np, Np), _BF16),              # resident adjacency
            pltpu.VMEM((Np, Cx_p), jnp.float32),      # layer-0 agg accumulator
            pltpu.SemaphoreType.DMA((n_tiles,)),      # per-tile DMA completion
        ],
        compiler_params=pltpu.CompilerParams(vmem_limit_bytes=vmem_limit),
        cost_estimate=cost,
    )(*operands)

    return out_pad[:G, :out_channels]


# ---------------------------------------------------------------------------
# Deterministic parameter initialization (synthetic, not a checkpoint load)
# ---------------------------------------------------------------------------
def _linear(key, fan_in, fan_out):
    kw, kb = jax.random.split(key)
    bound = 1.0 / np.sqrt(fan_in)
    # stored transposed relative to torch: (in, out) so kernel does x @ W
    w = jax.random.uniform(kw, (fan_in, fan_out), jnp.float32, -bound, bound)
    b = jax.random.uniform(kb, (1, fan_out), jnp.float32, -bound, bound)
    return w, b


def _bn_fold(key, c):
    k1, k2, k3, k4 = jax.random.split(key, 4)
    gamma = jax.random.uniform(k1, (1, c), jnp.float32, 0.5, 1.5)
    beta = 0.1 * jax.random.normal(k2, (1, c), jnp.float32)
    mean = 0.1 * jax.random.normal(k3, (1, c), jnp.float32)
    var = jax.random.uniform(k4, (1, c), jnp.float32, 0.5, 1.5)
    scale = gamma / jnp.sqrt(var + BN_EPS)
    shift = beta - mean * scale
    return scale, shift


def init_params(key, in_channels, hidden, out_channels, num_layers):
    layer_params = []
    cin = in_channels
    for i in range(num_layers):
        ks = jax.random.split(jax.random.fold_in(key, i), 5)
        w1, b1 = _linear(ks[0], cin, 2 * hidden)
        s1, t1 = _bn_fold(ks[1], 2 * hidden)
        w2, b2 = _linear(ks[2], 2 * hidden, hidden)
        s2, t2 = _bn_fold(ks[3], hidden)
        eps = 0.1 * jax.random.normal(ks[4], (1,), jnp.float32)
        layer_params.append(dict(eps=eps, w1=w1, b1=b1, s1=s1, t1=t1,
                                 w2=w2, b2=b2, s2=s2, t2=t2))
        cin = hidden
    kh = jax.random.fold_in(key, 1000)
    ks = jax.random.split(kh, 3)
    w1, b1 = _linear(ks[0], hidden, hidden)
    s, t = _bn_fold(ks[1], hidden)
    w2, b2 = _linear(ks[2], hidden, out_channels)
    head_params = dict(w1=w1, b1=b1, s=s, t=t, w2=w2, b2=b2)
    return layer_params, head_params


# ---------------------------------------------------------------------------
# Pure-JAX reference (original module ordering incl. bf16 matmul casts)
# ---------------------------------------------------------------------------
def reference_forward(x, A, P, layer_params, head_params):
    for p in layer_params:
        agg = jnp.dot(A.astype(_BF16), x.astype(_BF16),
                      preferred_element_type=jnp.float32)
        h = (1.0 + p["eps"][0]) * x + agg
        h = jnp.dot(h.astype(_BF16), p["w1"].astype(_BF16),
                    preferred_element_type=jnp.float32) + p["b1"]
        h = h * p["s1"] + p["t1"]
        h = jnp.where(h > 0, h, LEAKY_SLOPE * h)
        h = jnp.dot(h.astype(_BF16), p["w2"].astype(_BF16),
                    preferred_element_type=jnp.float32) + p["b2"]
        h = h * p["s2"] + p["t2"]
        x = jnp.maximum(h, 0.0)
    pooled = jnp.dot(P.astype(_BF16), x.astype(_BF16),
                     preferred_element_type=jnp.float32)
    h = jnp.dot(pooled.astype(_BF16), head_params["w1"].astype(_BF16),
                preferred_element_type=jnp.float32) + head_params["b1"]
    h = jnp.maximum(h * head_params["s"] + head_params["t"], 0.0)
    return jnp.dot(h.astype(_BF16), head_params["w2"].astype(_BF16),
                   preferred_element_type=jnp.float32) + head_params["b2"]


# ---------------------------------------------------------------------------
if __name__ == "__main__":
    key = jax.random.PRNGKey(0)
    # NOTE: demo shapes are tiny (per-invocation overhead dominates); validate
    # the DMA-overlap / VMEM-budget changes at Np=1024-4096 with xprof min-of-N.
    N, E, G = 16, 40, 2                       # nodes, edges, graphs in batch
    in_channels, hidden, out_channels = 8, 32, 4
    num_layers = 3

    kx, ksrc, kdst, kbatch, kparam = jax.random.split(key, 5)
    x = jax.random.normal(kx, (N, in_channels), jnp.float32)
    src = jax.random.randint(ksrc, (E,), 0, N)          # edge_index[0]
    dst = jax.random.randint(kdst, (E,), 0, N)          # edge_index[1]
    batch = jnp.sort(jax.random.randint(kbatch, (N,), 0, G))

    # dense adjacency: A[dst, src] counts edges (PyG GINConv aggregates x_j = x[src] at dst)
    A = jnp.zeros((N, N), jnp.float32).at[dst, src].add(1.0)
    # dense pooling matrix: P[g, n] = 1 if batch[n] == g
    P = (batch[None, :] == jnp.arange(G)[:, None]).astype(jnp.float32)

    layer_params, head_params = init_params(kparam, in_channels, hidden,
                                            out_channels, num_layers)

    fwd = jax.jit(gin_model_forward)
    out = jax.block_until_ready(fwd(x, A, P, layer_params, head_params))

    ref = reference_forward(x, A, P, layer_params, head_params)
    assert out.shape == (G, out_channels)
    np.testing.assert_allclose(np.asarray(out), np.asarray(ref),
                               rtol=1e-3, atol=1e-3)
    print("KERNEL_OK")
</pallas_src>

<mosaic_0001>
module attributes {stable_mosaic.version = 11 : i64} {
  func.func @kernel(%arg0: memref<3xf32, #tpu.memory_space<smem>>, %arg1: memref<128x128xf32, #tpu.memory_space<vmem>>, %arg2: memref<8x128xbf16, #tpu.memory_space<vmem>>, %arg3: memref<128x128xbf16, #tpu.memory_space<any>>, %arg4: memref<3x128x128xbf16, #tpu.memory_space<vmem>>, %arg5: memref<3x1x128xf32, #tpu.memory_space<vmem>>, %arg6: memref<3x1x128xf32, #tpu.memory_space<vmem>>, %arg7: memref<3x128x128xbf16, #tpu.memory_space<vmem>>, %arg8: memref<3x1x128xf32, #tpu.memory_space<vmem>>, %arg9: memref<3x1x128xf32, #tpu.memory_space<vmem>>, %arg10: memref<128x128xbf16, #tpu.memory_space<vmem>>, %arg11: memref<1x128xf32, #tpu.memory_space<vmem>>, %arg12: memref<1x128xf32, #tpu.memory_space<vmem>>, %arg13: memref<128x128xbf16, #tpu.memory_space<vmem>>, %arg14: memref<1x128xf32, #tpu.memory_space<vmem>>, %arg15: memref<8x128xf32, #tpu.memory_space<vmem>>, %arg16: memref<128x128xbf16, #tpu.memory_space<vmem>>, %arg17: memref<128x128xf32, #tpu.memory_space<vmem>>, %arg18: memref<1x!tpu.dma_semaphore, #tpu.memory_space<semaphore_mem>>) attributes {dimension_semantics = [], scalar_prefetch = 0 : i64, scratch_operands = 3 : i64, tpu.core_type = #tpu.core_type<tc>} {
    %c0_i32 = arith.constant 0 : i32
    %c0_i32_0 = arith.constant 0 : i32
    %c0_i32_1 = arith.constant 0 : i32
    %0 = tpu.memref_slice %arg3[%c0_i32_0, %c0_i32_1] : memref<128x128xbf16, #tpu.memory_space<any>> -> memref<128x128xbf16, #tpu.memory_space<any>>
    %c0_i32_2 = arith.constant 0 : i32
    %c0_i32_3 = arith.constant 0 : i32
    %1 = tpu.memref_slice %arg16[%c0_i32_2, %c0_i32_3] : memref<128x128xbf16, #tpu.memory_space<vmem>> -> memref<128x128xbf16, #tpu.memory_space<vmem>>
    %2 = tpu.memref_slice %arg18[%c0_i32] : memref<1x!tpu.dma_semaphore, #tpu.memory_space<semaphore_mem>> -> memref<1x!tpu.dma_semaphore, #tpu.memory_space<semaphore_mem>>
    %3 = tpu.memref_squeeze %2 : memref<1x!tpu.dma_semaphore, #tpu.memory_space<semaphore_mem>> -> memref<!tpu.dma_semaphore, #tpu.memory_space<semaphore_mem>>
    tpu.enqueue_dma source(%0 : memref<128x128xbf16, #tpu.memory_space<any>>) target(%1 : memref<128x128xbf16, #tpu.memory_space<vmem>>) target_semaphore(%3 : memref<!tpu.dma_semaphore, #tpu.memory_space<semaphore_mem>>)
    %c0 = arith.constant 0 : index
    %c0_4 = arith.constant 0 : index
    %4 = vector.load %arg1[%c0, %c0_4] : memref<128x128xf32, #tpu.memory_space<vmem>>, vector<128x128xf32>
    %5 = arith.truncf %4 : vector<128x128xf32> to vector<128x128xbf16>
    %c0_i32_5 = arith.constant 0 : i32
    %c0_i32_6 = arith.constant 0 : i32
    %c0_i32_7 = arith.constant 0 : i32
    %6 = tpu.memref_slice %arg3[%c0_i32_6, %c0_i32_7] : memref<128x128xbf16, #tpu.memory_space<any>> -> memref<128x128xbf16, #tpu.memory_space<any>>
    %c0_i32_8 = arith.constant 0 : i32
    %c0_i32_9 = arith.constant 0 : i32
    %7 = tpu.memref_slice %arg16[%c0_i32_8, %c0_i32_9] : memref<128x128xbf16, #tpu.memory_space<vmem>> -> memref<128x128xbf16, #tpu.memory_space<vmem>>
    %8 = tpu.memref_slice %arg18[%c0_i32_5] : memref<1x!tpu.dma_semaphore, #tpu.memory_space<semaphore_mem>> -> memref<1x!tpu.dma_semaphore, #tpu.memory_space<semaphore_mem>>
    %9 = tpu.memref_squeeze %8 : memref<1x!tpu.dma_semaphore, #tpu.memory_space<semaphore_mem>> -> memref<!tpu.dma_semaphore, #tpu.memory_space<semaphore_mem>>
    tpu.wait_dma2 semaphore(%9 : memref<!tpu.dma_semaphore, #tpu.memory_space<semaphore_mem>>) src(%6 : memref<128x128xbf16, #tpu.memory_space<any>>) dst(%7 : memref<128x128xbf16, #tpu.memory_space<vmem>>)
    %c0_10 = arith.constant 0 : index
    %c0_11 = arith.constant 0 : index
    %10 = vector.load %arg16[%c0_10, %c0_11] : memref<128x128xbf16, #tpu.memory_space<vmem>>, vector<128x128xbf16>
    %cst = arith.constant dense<0.000000e+00> : vector<128x128xf32>
    %11 = tpu.matmul %10, %5, %cst {dimension_numbers = #tpu.dot_dimension_numbers<[1], [0], [0], [1], [0, 0, 1, 1], [], []>} : vector<128x128xbf16>, vector<128x128xbf16>, vector<128x128xf32> -> vector<128x128xf32>
    %c0_12 = arith.constant 0 : index
    %c0_13 = arith.constant 0 : index
    %12 = vector.load %arg17[%c0_12, %c0_13] : memref<128x128xf32, #tpu.memory_space<vmem>>, vector<128x128xf32>
    tpu.vector_store %arg17[%c0_12, %c0_13], %11 {strides = array<i32>} : memref<128x128xf32, #tpu.memory_space<vmem>>, vector<128x128xf32>,
    %c0_14 = arith.constant 0 : index
    %c0_15 = arith.constant 0 : index
    %13 = vector.load %arg17[%c0_14, %c0_15] : memref<128x128xf32, #tpu.memory_space<vmem>>, vector<128x128xf32>
    %c0_16 = arith.constant 0 : index
    %14 = memref.load %arg0[%c0_16] : memref<3xf32, #tpu.memory_space<smem>>
    %15 = vector.broadcast %14 : f32 to vector<128x128xf32>
    %16 = arith.mulf %15, %4 : vector<128x128xf32>
    %17 = arith.addf %16, %13 : vector<128x128xf32>
    %18 = arith.truncf %17 : vector<128x128xf32> to vector<128x128xbf16>
    %c0_17 = arith.constant 0 : index
    %c0_18 = arith.constant 0 : index
    %c0_19 = arith.constant 0 : index
    %19 = vector.load %arg4[%c0_17, %c0_18, %c0_19] : memref<3x128x128xbf16, #tpu.memory_space<vmem>>, vector<1x128x128xbf16>
    %20 = vector.shape_cast %19 : vector<1x128x128xbf16> to vector<128x128xbf16>
    %cst_20 = arith.constant dense<0.000000e+00> : vector<128x128xf32>
    %21 = tpu.matmul %18, %20, %cst_20 {dimension_numbers = #tpu.dot_dimension_numbers<[1], [0], [0], [1], [0, 0, 1, 1], [], []>} : vector<128x128xbf16>, vector<128x128xbf16>, vector<128x128xf32> -> vector<128x128xf32>
    %c0_21 = arith.constant 0 : index
    %c0_22 = arith.constant 0 : index
    %c0_23 = arith.constant 0 : index
    %22 = vector.load %arg5[%c0_21, %c0_22, %c0_23] : memref<3x1x128xf32, #tpu.memory_space<vmem>>, vector<1x1x128xf32>
    %23 = vector.shape_cast %22 : vector<1x1x128xf32> to vector<1x128xf32>
    %24 = vector.broadcast %23 : vector<1x128xf32> to vector<128x128xf32>
    %25 = arith.mulf %21, %24 : vector<128x128xf32>
    %c0_24 = arith.constant 0 : index
    %c0_25 = arith.constant 0 : index
    %c0_26 = arith.constant 0 : index
    %26 = vector.load %arg6[%c0_24, %c0_25, %c0_26] : memref<3x1x128xf32, #tpu.memory_space<vmem>>, vector<1x1x128xf32>
    %27 = vector.shape_cast %26 : vector<1x1x128xf32> to vector<1x128xf32>
    %28 = vector.broadcast %27 : vector<1x128xf32> to vector<128x128xf32>
    %29 = arith.addf %25, %28 : vector<128x128xf32>
    %cst_27 = arith.constant 0.000000e+00 : f32
    %30 = vector.broadcast %cst_27 : f32 to vector<128x128xf32>
    %31 = arith.cmpf ogt, %29, %30 : vector<128x128xf32>
    %cst_28 = arith.constant 0.00999999977 : f32
    %32 = vector.broadcast %cst_28 : f32 to vector<128x128xf32>
    %33 = arith.mulf %32, %29 : vector<128x128xf32>
    %34 = arith.select %31, %29, %33 : vector<128x128xi1>, vector<128x128xf32>
    %35 = arith.truncf %34 : vector<128x128xf32> to vector<128x128xbf16>
    %c0_29 = arith.constant 0 : index
    %c0_30 = arith.constant 0 : index
    %c0_31 = arith.constant 0 : index
    %36 = vector.load %arg7[%c0_29, %c0_30, %c0_31] : memref<3x128x128xbf16, #tpu.memory_space<vmem>>, vector<1x128x128xbf16>
    %37 = vector.shape_cast %36 : vector<1x128x128xbf16> to vector<128x128xbf16>
    %cst_32 = arith.constant dense<0.000000e+00> : vector<128x128xf32>
    %38 = tpu.matmul %35, %37, %cst_32 {dimension_numbers = #tpu.dot_dimension_numbers<[1], [0], [0], [1], [0, 0, 1, 1], [], []>} : vector<128x128xbf16>, vector<128x128xbf16>, vector<128x128xf32> -> vector<128x128xf32>
    %c0_33 = arith.constant 0 : index
    %c0_34 = arith.constant 0 : index
    %c0_35 = arith.constant 0 : index
    %39 = vector.load %arg8[%c0_33, %c0_34, %c0_35] : memref<3x1x128xf32, #tpu.memory_space<vmem>>, vector<1x1x128xf32>
    %40 = vector.shape_cast %39 : vector<1x1x128xf32> to vector<1x128xf32>
    %41 = vector.broadcast %40 : vector<1x128xf32> to vector<128x128xf32>
    %42 = arith.mulf %38, %41 : vector<128x128xf32>
    %c0_36 = arith.constant 0 : index
    %c0_37 = arith.constant 0 : index
    %c0_38 = arith.constant 0 : index
    %43 = vector.load %arg9[%c0_36, %c0_37, %c0_38] : memref<3x1x128xf32, #tpu.memory_space<vmem>>, vector<1x1x128xf32>
    %44 = vector.shape_cast %43 : vector<1x1x128xf32> to vector<1x128xf32>
    %45 = vector.broadcast %44 : vector<1x128xf32> to vector<128x128xf32>
    %46 = arith.addf %42, %45 : vector<128x128xf32>
    %cst_39 = arith.constant 0.000000e+00 : f32
    %47 = vector.broadcast %cst_39 : f32 to vector<128x128xf32>
    %48 = arith.maximumf %46, %47 : vector<128x128xf32>
    %49 = arith.truncf %48 : vector<128x128xf32> to vector<128x128xbf16>
    %c0_40 = arith.constant 0 : index
    %c0_41 = arith.constant 0 : index
    %50 = vector.load %arg16[%c0_40, %c0_41] : memref<128x128xbf16, #tpu.memory_space<vmem>>, vector<128x128xbf16>
    %cst_42 = arith.constant dense<0.000000e+00> : vector<128x128xf32>
    %51 = tpu.matmul %50, %49, %cst_42 {dimension_numbers = #tpu.dot_dimension_numbers<[1], [0], [0], [1], [0, 0, 1, 1], [], []>} : vector<128x128xbf16>, vector<128x128xbf16>, vector<128x128xf32> -> vector<128x128xf32>
    %c1 = arith.constant 1 : index
    %52 = memref.load %arg0[%c1] : memref<3xf32, #tpu.memory_space<smem>>
    %53 = vector.broadcast %52 : f32 to vector<128x128xf32>
    %54 = arith.mulf %53, %48 : vector<128x128xf32>
    %55 = arith.addf %54, %51 : vector<128x128xf32>
    %56 = arith.truncf %55 : vector<128x128xf32> to vector<128x128xbf16>
    %c1_43 = arith.constant 1 : index
    %c0_44 = arith.constant 0 : index
    %c0_45 = arith.constant 0 : index
    %57 = vector.load %arg4[%c1_43, %c0_44, %c0_45] : memref<3x128x128xbf16, #tpu.memory_space<vmem>>, vector<1x128x128xbf16>
    %58 = vector.shape_cast %57 : vector<1x128x128xbf16> to vector<128x128xbf16>
    %cst_46 = arith.constant dense<0.000000e+00> : vector<128x128xf32>
    %59 = tpu.matmul %56, %58, %cst_46 {dimension_numbers = #tpu.dot_dimension_numbers<[1], [0], [0], [1], [0, 0, 1, 1], [], []>} : vector<128x128xbf16>, vector<128x128xbf16>, vector<128x128xf32> -> vector<128x128xf32>
    %c1_47 = arith.constant 1 : index
    %c0_48 = arith.constant 0 : index
    %c0_49 = arith.constant 0 : index
    %60 = vector.load %arg5[%c1_47, %c0_48, %c0_49] : memref<3x1x128xf32, #tpu.memory_space<vmem>>, vector<1x1x128xf32>
    %61 = vector.shape_cast %60 : vector<1x1x128xf32> to vector<1x128xf32>
    %62 = vector.broadcast %61 : vector<1x128xf32> to vector<128x128xf32>
    %63 = arith.mulf %59, %62 : vector<128x128xf32>
    %c1_50 = arith.constant 1 : index
    %c0_51 = arith.constant 0 : index
    %c0_52 = arith.constant 0 : index
    %64 = vector.load %arg6[%c1_50, %c0_51, %c0_52] : memref<3x1x128xf32, #tpu.memory_space<vmem>>, vector<1x1x128xf32>
    %65 = vector.shape_cast %64 : vector<1x1x128xf32> to vector<1x128xf32>
    %66 = vector.broadcast %65 : vector<1x128xf32> to vector<128x128xf32>
    %67 = arith.addf %63, %66 : vector<128x128xf32>
    %cst_53 = arith.constant 0.000000e+00 : f32
    %68 = vector.broadcast %cst_53 : f32 to vector<128x128xf32>
    %69 = arith.cmpf ogt, %67, %68 : vector<128x128xf32>
    %cst_54 = arith.constant 0.00999999977 : f32
    %70 = vector.broadcast %cst_54 : f32 to vector<128x128xf32>
    %71 = arith.mulf %70, %67 : vector<128x128xf32>
    %72 = arith.select %69, %67, %71 : vector<128x128xi1>, vector<128x128xf32>
    %73 = arith.truncf %72 : vector<128x128xf32> to vector<128x128xbf16>
    %c1_55 = arith.constant 1 : index
    %c0_56 = arith.constant 0 : index
    %c0_57 = arith.constant 0 : index
    %74 = vector.load %arg7[%c1_55, %c0_56, %c0_57] : memref<3x128x128xbf16, #tpu.memory_space<vmem>>, vector<1x128x128xbf16>
    %75 = vector.shape_cast %74 : vector<1x128x128xbf16> to vector<128x128xbf16>
    %cst_58 = arith.constant dense<0.000000e+00> : vector<128x128xf32>
    %76 = tpu.matmul %73, %75, %cst_58 {dimension_numbers = #tpu.dot_dimension_numbers<[1], [0], [0], [1], [0, 0, 1, 1], [], []>} : vector<128x128xbf16>, vector<128x128xbf16>, vector<128x128xf32> -> vector<128x128xf32>
    %c1_59 = arith.constant 1 : index
    %c0_60 = arith.constant 0 : index
    %c0_61 = arith.constant 0 : index
    %77 = vector.load %arg8[%c1_59, %c0_60, %c0_61] : memref<3x1x128xf32, #tpu.memory_space<vmem>>, vector<1x1x128xf32>
    %78 = vector.shape_cast %77 : vector<1x1x128xf32> to vector<1x128xf32>
    %79 = vector.broadcast %78 : vector<1x128xf32> to vector<128x128xf32>
    %80 = arith.mulf %76, %79 : vector<128x128xf32>
    %c1_62 = arith.constant 1 : index
    %c0_63 = arith.constant 0 : index
    %c0_64 = arith.constant 0 : index
    %81 = vector.load %arg9[%c1_62, %c0_63, %c0_64] : memref<3x1x128xf32, #tpu.memory_space<vmem>>, vector<1x1x128xf32>
    %82 = vector.shape_cast %81 : vector<1x1x128xf32> to vector<1x128xf32>
    %83 = vector.broadcast %82 : vector<1x128xf32> to vector<128x128xf32>
    %84 = arith.addf %80, %83 : vector<128x128xf32>
    %cst_65 = arith.constant 0.000000e+00 : f32
    %85 = vector.broadcast %cst_65 : f32 to vector<128x128xf32>
    %86 = arith.maximumf %84, %85 : vector<128x128xf32>
    %87 = arith.truncf %86 : vector<128x128xf32> to vector<128x128xbf16>
    %c0_66 = arith.constant 0 : index
    %c0_67 = arith.constant 0 : index
    %88 = vector.load %arg16[%c0_66, %c0_67] : memref<128x128xbf16, #tpu.memory_space<vmem>>, vector<128x128xbf16>
    %cst_68 = arith.constant dense<0.000000e+00> : vector<128x128xf32>
    %89 = tpu.matmul %88, %87, %cst_68 {dimension_numbers = #tpu.dot_dimension_numbers<[1], [0], [0], [1], [0, 0, 1, 1], [], []>} : vector<128x128xbf16>, vector<128x128xbf16>, vector<128x128xf32> -> vector<128x128xf32>
    %c2 = arith.constant 2 : index
    %90 = memref.load %arg0[%c2] : memref<3xf32, #tpu.memory_space<smem>>
    %91 = vector.broadcast %90 : f32 to vector<128x128xf32>
    %92 = arith.mulf %91, %86 : vector<128x128xf32>
    %93 = arith.addf %92, %89 : vector<128x128xf32>
    %94 = arith.truncf %93 : vector<128x128xf32> to vector<128x128xbf16>
    %c2_69 = arith.constant 2 : index
    %c0_70 = arith.constant 0 : index
    %c0_71 = arith.constant 0 : index
    %95 = vector.load %arg4[%c2_69, %c0_70, %c0_71] : memref<3x128x128xbf16, #tpu.memory_space<vmem>>, vector<1x128x128xbf16>
    %96 = vector.shape_cast %95 : vector<1x128x128xbf16> to vector<128x128xbf16>
    %cst_72 = arith.constant dense<0.000000e+00> : vector<128x128xf32>
    %97 = tpu.matmul %94, %96, %cst_72 {dimension_numbers = #tpu.dot_dimension_numbers<[1], [0], [0], [1], [0, 0, 1, 1], [], []>} : vector<128x128xbf16>, vector<128x128xbf16>, vector<128x128xf32> -> vector<128x128xf32>
    %c2_73 = arith.constant 2 : index
    %c0_74 = arith.constant 0 : index
    %c0_75 = arith.constant 0 : index
    %98 = vector.load %arg5[%c2_73, %c0_74, %c0_75] : memref<3x1x128xf32, #tpu.memory_space<vmem>>, vector<1x1x128xf32>
    %99 = vector.shape_cast %98 : vector<1x1x128xf32> to vector<1x128xf32>
    %100 = vector.broadcast %99 : vector<1x128xf32> to vector<128x128xf32>
    %101 = arith.mulf %97, %100 : vector<128x128xf32>
    %c2_76 = arith.constant 2 : index
    %c0_77 = arith.constant 0 : index
    %c0_78 = arith.constant 0 : index
    %102 = vector.load %arg6[%c2_76, %c0_77, %c0_78] : memref<3x1x128xf32, #tpu.memory_space<vmem>>, vector<1x1x128xf32>
    %103 = vector.shape_cast %102 : vector<1x1x128xf32> to vector<1x128xf32>
    %104 = vector.broadcast %103 : vector<1x128xf32> to vector<128x128xf32>
    %105 = arith.addf %101, %104 : vector<128x128xf32>
    %cst_79 = arith.constant 0.000000e+00 : f32
    %106 = vector.broadcast %cst_79 : f32 to vector<128x128xf32>
    %107 = arith.cmpf ogt, %105, %106 : vector<128x128xf32>
    %cst_80 = arith.constant 0.00999999977 : f32
    %108 = vector.broadcast %cst_80 : f32 to vector<128x128xf32>
    %109 = arith.mulf %108, %105 : vector<128x128xf32>
    %110 = arith.select %107, %105, %109 : vector<128x128xi1>, vector<128x128xf32>
    %111 = arith.truncf %110 : vector<128x128xf32> to vector<128x128xbf16>
    %c2_81 = arith.constant 2 : index
    %c0_82 = arith.constant 0 : index
    %c0_83 = arith.constant 0 : index
    %112 = vector.load %arg7[%c2_81, %c0_82, %c0_83] : memref<3x128x128xbf16, #tpu.memory_space<vmem>>, vector<1x128x128xbf16>
    %113 = vector.shape_cast %112 : vector<1x128x128xbf16> to vector<128x128xbf16>
    %cst_84 = arith.constant dense<0.000000e+00> : vector<128x128xf32>
    %114 = tpu.matmul %111, %113, %cst_84 {dimension_numbers = #tpu.dot_dimension_numbers<[1], [0], [0], [1], [0, 0, 1, 1], [], []>} : vector<128x128xbf16>, vector<128x128xbf16>, vector<128x128xf32> -> vector<128x128xf32>
    %c2_85 = arith.constant 2 : index
    %c0_86 = arith.constant 0 : index
    %c0_87 = arith.constant 0 : index
    %115 = vector.load %arg8[%c2_85, %c0_86, %c0_87] : memref<3x1x128xf32, #tpu.memory_space<vmem>>, vector<1x1x128xf32>
    %116 = vector.shape_cast %115 : vector<1x1x128xf32> to vector<1x128xf32>
    %117 = vector.broadcast %116 : vector<1x128xf32> to vector<128x128xf32>
    %118 = arith.mulf %114, %117 : vector<128x128xf32>
    %c2_88 = arith.constant 2 : index
    %c0_89 = arith.constant 0 : index
    %c0_90 = arith.constant 0 : index
    %119 = vector.load %arg9[%c2_88, %c0_89, %c0_90] : memref<3x1x128xf32, #tpu.memory_space<vmem>>, vector<1x1x128xf32>
    %120 = vector.shape_cast %119 : vector<1x1x128xf32> to vector<1x128xf32>
    %121 = vector.broadcast %120 : vector<1x128xf32> to vector<128x128xf32>
    %122 = arith.addf %118, %121 : vector<128x128xf32>
    %cst_91 = arith.constant 0.000000e+00 : f32
    %123 = vector.broadcast %cst_91 : f32 to vector<128x128xf32>
    %124 = arith.maximumf %122, %123 : vector<128x128xf32>
    %c0_92 = arith.constant 0 : index
    %c0_93 = arith.constant 0 : index
    %125 = vector.load %arg2[%c0_92, %c0_93] : memref<8x128xbf16, #tpu.memory_space<vmem>>, vector<8x128xbf16>
    %126 = arith.truncf %124 : vector<128x128xf32> to vector<128x128xbf16>
    %cst_94 = arith.constant dense<0.000000e+00> : vector<8x128xf32>
    %127 = tpu.matmul %125, %126, %cst_94 {dimension_numbers = #tpu.dot_dimension_numbers<[1], [0], [0], [1], [0, 0, 1, 1], [], []>} : vector<8x128xbf16>, vector<128x128xbf16>, vector<8x128xf32> -> vector<8x128xf32>
    %128 = arith.truncf %127 : vector<8x128xf32> to vector<8x128xbf16>
    %c0_95 = arith.constant 0 : index
    %c0_96 = arith.constant 0 : index
    %129 = vector.load %arg10[%c0_95, %c0_96] : memref<128x128xbf16, #tpu.memory_space<vmem>>, vector<128x128xbf16>
    %cst_97 = arith.constant dense<0.000000e+00> : vector<8x128xf32>
    %130 = tpu.matmul %128, %129, %cst_97 {dimension_numbers = #tpu.dot_dimension_numbers<[1], [0], [0], [1], [0, 0, 1, 1], [], []>} : vector<8x128xbf16>, vector<128x128xbf16>, vector<8x128xf32> -> vector<8x128xf32>
    %c0_98 = arith.constant 0 : index
    %c0_99 = arith.constant 0 : index
    %131 = vector.load %arg11[%c0_98, %c0_99] : memref<1x128xf32, #tpu.memory_space<vmem>>, vector<1x128xf32>
    %132 = vector.broadcast %131 : vector<1x128xf32> to vector<8x128xf32>
    %133 = arith.mulf %130, %132 : vector<8x128xf32>
    %c0_100 = arith.constant 0 : index
    %c0_101 = arith.constant 0 : index
    %134 = vector.load %arg12[%c0_100, %c0_101] : memref<1x128xf32, #tpu.memory_space<vmem>>, vector<1x128xf32>
    %135 = vector.broadcast %134 : vector<1x128xf32> to vector<8x128xf32>
    %136 = arith.addf %133, %135 : vector<8x128xf32>
    %cst_102 = arith.constant 0.000000e+00 : f32
    %137 = vector.broadcast %cst_102 : f32 to vector<8x128xf32>
    %138 = arith.maximumf %136, %137 : vector<8x128xf32>
    %139 = arith.truncf %138 : vector<8x128xf32> to vector<8x128xbf16>
    %c0_103 = arith.constant 0 : index
    %c0_104 = arith.constant 0 : index
    %140 = vector.load %arg13[%c0_103, %c0_104] : memref<128x128xbf16, #tpu.memory_space<vmem>>, vector<128x128xbf16>
    %cst_105 = arith.constant dense<0.000000e+00> : vector<8x128xf32>
    %141 = tpu.matmul %139, %140, %cst_105 {dimension_numbers = #tpu.dot_dimension_numbers<[1], [0], [0], [1], [0, 0, 1, 1], [], []>} : vector<8x128xbf16>, vector<128x128xbf16>, vector<8x128xf32> -> vector<8x128xf32>
    %c0_106 = arith.constant 0 : index
    %c0_107 = arith.constant 0 : index
    %142 = vector.load %arg14[%c0_106, %c0_107] : memref<1x128xf32, #tpu.memory_space<vmem>>, vector<1x128xf32>
    %143 = vector.broadcast %142 : vector<1x128xf32> to vector<8x128xf32>
    %144 = arith.addf %141, %143 : vector<8x128xf32>
    %c0_108 = arith.constant 0 : index
    %c0_109 = arith.constant 0 : index
    %145 = vector.load %arg15[%c0_108, %c0_109] : memref<8x128xf32, #tpu.memory_space<vmem>>, vector<8x128xf32>
    tpu.vector_store %arg15[%c0_108, %c0_109], %144 {strides = array<i32>} : memref<8x128xf32, #tpu.memory_space<vmem>>, vector<8x128xf32>,
    return
  }
}

</mosaic_0001>

<llo_original>
// kernel: gin_model_forward.1
$region0: #{gin_model_forward.1}
  #allocation0 [shape = 'u32[]', space=smem, size = 0x4, offset = 0x4, fixed_abs, tag = 'smem constant byte address 0x4 - core index']
  #allocation1 [shape = 'u32[72,128]{1,0:T(1,128)}', space=vmem, size = 0x9000, scoped, tag = 'internal scratch']
  #allocation2 [shape = 'bf16[128,128]{1,0:T(8,128)(2,1)}', space=vmem, size = 0x8000, scoped, tag = 'scratch operand']
  #allocation3 [shape = 'f32[128,128]{1,0:T(8,128)}', space=vmem, size = 0x10000, scoped, tag = 'scratch operand']
  #allocation4 [shape = 's32[1]{0}', space=sflag, size = 0x4, scoped, tag = 'scratch operand']
  #allocation7 [shape = 's32[]', space=sflag, size = 0x4, offset = 0, fixed_abs, tag = 'sflag constant byte address 0x0 - dummy sync flag']
  %s0 = inlined_call_operand.vmem [shape: f32[3], index: 0, kind: input, shape index: {}]
  %s1 = inlined_call_operand.vmem [shape: f32[128,128], index: 1, kind: input, shape index: {}]
  %s2 = inlined_call_operand.vmem [shape: bf16[8,128], index: 2, kind: input, shape index: {}]
  %s3 = inlined_call_operand.vmem [shape: bf16[128,128], index: 3, kind: input, shape index: {}]
  %s4 = inlined_call_operand.vmem [shape: bf16[3,128,128], index: 4, kind: input, shape index: {}]
  %s5 = inlined_call_operand.vmem [shape: f32[3,1,128], index: 5, kind: input, shape index: {}]
  %s6 = inlined_call_operand.vmem [shape: f32[3,1,128], index: 6, kind: input, shape index: {}]
  %s7 = inlined_call_operand.vmem [shape: bf16[3,128,128], index: 7, kind: input, shape index: {}]
  %s8 = inlined_call_operand.vmem [shape: f32[3,1,128], index: 8, kind: input, shape index: {}]
  %s9 = inlined_call_operand.vmem [shape: f32[3,1,128], index: 9, kind: input, shape index: {}]
  %s10 = inlined_call_operand.vmem [shape: bf16[128,128], index: 10, kind: input, shape index: {}]
  %s11 = inlined_call_operand.vmem [shape: f32[1,128], index: 11, kind: input, shape index: {}]
  %s12 = inlined_call_operand.vmem [shape: f32[1,128], index: 12, kind: input, shape index: {}]
  %s13 = inlined_call_operand.vmem [shape: bf16[128,128], index: 13, kind: input, shape index: {}]
  %s14 = inlined_call_operand.vmem [shape: f32[1,128], index: 14, kind: input, shape index: {}]
  %s15 = inlined_call_operand.vmem [shape: f32[8,128], index: 15, kind: output, shape index: {}]
  %s16 = sld [smem:[#allocation0]]
  $region89: #{gin_model_forward.1} parent=0
    _
  %s18 = ssub.s32 1, %s16
  %s19 = scalar_select 0, %s18, %s16
  $region1: #{gin_model_forward.1} parent=0
    #allocation5 [shape = 'u8[512]{0}', space=smem, size = 0x200, scoped, tag = 'input window, operand 0, single buffered']
    #allocation6 [shape = 's32[1]{0}', space=sflag, size = 0x4, scoped, tag = 'scoped memory for gin_model_forward.1']
    %20 = vsyncpa [#allocation6], 0
    // Predicated region
    $region2: #{gin_model_forward.1} parent=1 // pred_check
      _
    $region3: #{gin_model_forward.1} parent=1 // pred_check_branch
      %22 = sbr.rel (0) target = $region5
    $region4: #{gin_model_forward.1} parent=1 // pred_region
      %24 = vsyncadd [#allocation6], 0
      %s26 = sshll.u32 %s0, 4
      %s27 = int_to_ptr.vmem [resolvable:$true] %s26
      %29 = dma.vmem_to_smem %s27, 16, [#allocation5], [#allocation6]
    $region5: #{gin_model_forward.1} parent=1 // pred_fallthru
      _
    // Predicated region
    $region6: #{gin_model_forward.1} parent=1 // pred_check
      _
    $region7: #{gin_model_forward.1} parent=1 // pred_check_branch
      %31 = sbr.rel (0) target = $region9
    $region8: #{gin_model_forward.1} parent=1 // pred_region
      _
    $region9: #{gin_model_forward.1} parent=1 // pred_fallthru
      _
    // Predicated region
    $region10: #{gin_model_forward.1} parent=1 // pred_check
      _
    $region11: #{gin_model_forward.1} parent=1 // pred_check_branch
      %33 = sbr.rel (0) target = $region13
    $region12: #{gin_model_forward.1} parent=1 // pred_region
      _
    $region13: #{gin_model_forward.1} parent=1 // pred_fallthru
      _
    // Predicated region
    $region14: #{gin_model_forward.1} parent=1 // pred_check
      _
    $region15: #{gin_model_forward.1} parent=1 // pred_check_branch
      %35 = sbr.rel (0) target = $region17
    $region16: #{gin_model_forward.1} parent=1 // pred_region
      _
    $region17: #{gin_model_forward.1} parent=1 // pred_fallthru
      _
    // Predicated region
    $region18: #{gin_model_forward.1} parent=1 // pred_check
      _
    $region19: #{gin_model_forward.1} parent=1 // pred_check_branch
      %37 = sbr.rel (0) target = $region21
    $region20: #{gin_model_forward.1} parent=1 // pred_region
      _
    $region21: #{gin_model_forward.1} parent=1 // pred_fallthru
      _
    // Predicated region
    $region22: #{gin_model_forward.1} parent=1 // pred_check
      _
    $region23: #{gin_model_forward.1} parent=1 // pred_check_branch
      %39 = sbr.rel (0) target = $region25
    $region24: #{gin_model_forward.1} parent=1 // pred_region
      _
    $region25: #{gin_model_forward.1} parent=1 // pred_fallthru
      _
    // Predicated region
    $region26: #{gin_model_forward.1} parent=1 // pred_check
      _
    $region27: #{gin_model_forward.1} parent=1 // pred_check_branch
      %41 = sbr.rel (0) target = $region29
    $region28: #{gin_model_forward.1} parent=1 // pred_region
      _
    $region29: #{gin_model_forward.1} parent=1 // pred_fallthru
      _
    // Predicated region
    $region30: #{gin_model_forward.1} parent=1 // pred_check
      _
    $region31: #{gin_model_forward.1} parent=1 // pred_check_branch
      %43 = sbr.rel (0) target = $region33
    $region32: #{gin_model_forward.1} parent=1 // pred_region
      _
    $region33: #{gin_model_forward.1} parent=1 // pred_fallthru
      _
    // Predicated region
    $region34: #{gin_model_forward.1} parent=1 // pred_check
      _
    $region35: #{gin_model_forward.1} parent=1 // pred_check_branch
      %45 = sbr.rel (0) target = $region37
    $region36: #{gin_model_forward.1} parent=1 // pred_region
      _
    $region37: #{gin_model_forward.1} parent=1 // pred_fallthru
      _
    // Predicated region
    $region38: #{gin_model_forward.1} parent=1 // pred_check
      _
    $region39: #{gin_model_forward.1} parent=1 // pred_check_branch
      %47 = sbr.rel (0) target = $region41
    $region40: #{gin_model_forward.1} parent=1 // pred_region
      _
    $region41: #{gin_model_forward.1} parent=1 // pred_fallthru
      _
    // Predicated region
    $region42: #{gin_model_forward.1} parent=1 // pred_check
      _
    $region43: #{gin_model_forward.1} parent=1 // pred_check_branch
      %49 = sbr.rel (0) target = $region45
    $region44: #{gin_model_forward.1} parent=1 // pred_region
      _
    $region45: #{gin_model_forward.1} parent=1 // pred_fallthru
      _
    // Predicated region
    $region46: #{gin_model_forward.1} parent=1 // pred_check
      _
    $region47: #{gin_model_forward.1} parent=1 // pred_check_branch
      %51 = sbr.rel (0) target = $region49
    $region48: #{gin_model_forward.1} parent=1 // pred_region
      _
    $region49: #{gin_model_forward.1} parent=1 // pred_fallthru
      _
    // Predicated region
    $region50: #{gin_model_forward.1} parent=1 // pred_check
      _
    $region51: #{gin_model_forward.1} parent=1 // pred_check_branch
      %53 = sbr.rel (0) target = $region53
    $region52: #{gin_model_forward.1} parent=1 // pred_region
      _
    $region53: #{gin_model_forward.1} parent=1 // pred_fallthru
      _
    // Predicated region
    $region54: #{gin_model_forward.1} parent=1 // pred_check
      _
    $region55: #{gin_model_forward.1} parent=1 // pred_check_branch
      %55 = sbr.rel (0) target = $region57
    $region56: #{gin_model_forward.1} parent=1 // pred_region
      _
    $region57: #{gin_model_forward.1} parent=1 // pred_fallthru
      _
    // Predicated region
    $region58: #{gin_model_forward.1} parent=1 // pred_check
      _
    $region59: #{gin_model_forward.1} parent=1 // pred_check_branch
      %57 = sbr.rel (0) target = $region61
    $region60: #{gin_model_forward.1} parent=1 // pred_region
      %59 = dma.done [#allocation6], 16
    $region61: #{gin_model_forward.1} parent=1 // pred_fallthru
      _
    %60 = sfence
    // Predicated region
    $region62: #{gin_model_forward.1} parent=1 // pred_check
      _
    $region63: #{gin_model_forward.1} parent=1 // pred_check_branch
      %62 = sbr.rel (0) target = $region65
    $region64: #{gin_model_forward.1} parent=1 // pred_region
      loop: start=0, step=1, limit=1
      $region66: #{gin_model_forward.1} parent=64 // loop_pre_header
        _
      $region67: #{gin_model_forward.1} parent=64 // loop_header
        %s64 = sphi 0, %s68
        %p65 = scmp.ge.s32.totalorder %s64, 1
        %s69 = sphi %s3, %s3
        %s70 = sphi [#allocation2], [#allocation2]
      $region68: #{gin_model_forward.1} parent=64 // loop_header_branch
        %67 = sbr.rel (%p65) target = $region72
      $region69: #{gin_model_forward.1} parent=64 // loop_body
        %v71 = vld [vmem:[%s69] sm:$0xff]
        %72 = vst [vmem:[%s70] sm:$0xff] %v71
        %v73 = vld [vmem:[%s69 + $0x8] sm:$0xff]
        %74 = vst [vmem:[%s70 + $0x8] sm:$0xff] %v73
        %v75 = vld [vmem:[%s69 + $0x10] sm:$0xff]
        %76 = vst [vmem:[%s70 + $0x10] sm:$0xff] %v75
        %v77 = vld [vmem:[%s69 + $0x18] sm:$0xff]
        %78 = vst [vmem:[%s70 + $0x18] sm:$0xff] %v77
        %v79 = vld [vmem:[%s69 + $0x20] sm:$0xff]
        %80 = vst [vmem:[%s70 + $0x20] sm:$0xff] %v79
        %v81 = vld [vmem:[%s69 + $0x28] sm:$0xff]
        %82 = vst [vmem:[%s70 + $0x28] sm:$0xff] %v81
        %v83 = vld [vmem:[%s69 + $0x30] sm:$0xff]
        %84 = vst [vmem:[%s70 + $0x30] sm:$0xff] %v83
        %v85 = vld [vmem:[%s69 + $0x38] sm:$0xff]
        %86 = vst [vmem:[%s70 + $0x38] sm:$0xff] %v85
      $region70: #{gin_model_forward.1} parent=64 // loop_footer
        %s68 = sadd.s32 1, %s64
      $region71: #{gin_model_forward.1} parent=64 // loop_footer_branch
        %63 = sbr.rel target = $region67
      $region72: #{gin_model_forward.1} parent=64 // loop_exit
        _
    $region65: #{gin_model_forward.1} parent=1 // pred_fallthru
      _
    // Predicated region
    $region73: #{gin_model_forward.1} parent=1 // pred_check
      _
    $region74: #{gin_model_forward.1} parent=1 // pred_check_branch
      %88 = sbr.rel target = $region76
    $region75: #{gin_model_forward.1} parent=1 // pred_region
      _
    $region76: #{gin_model_forward.1} parent=1 // pred_fallthru
      _
    // Predicated region
    $region77: #{gin_model_forward.1} parent=1 // pred_check
      _
    $region78: #{gin_model_forward.1} parent=1 // pred_check_branch
      %91 = sbr.rel (0) target = $region80
    $region79: #{gin_model_forward.1} parent=1 // pred_region
      %92 = vsyncadd [#allocation4], 1024
    $region80: #{gin_model_forward.1} parent=1 // pred_fallthru
      _
    %v93 = vld [vmem:[%s1] sm:$0xff]
    %v94 = vld [vmem:[%s1 + $0x8] sm:$0xff]
    %v95 = vld [vmem:[%s1 + $0x10] sm:$0xff]
    %v96 = vld [vmem:[%s1 + $0x18] sm:$0xff]
    %v97 = vld [vmem:[%s1 + $0x20] sm:$0xff]
    %v98 = vld [vmem:[%s1 + $0x28] sm:$0xff]
    %v99 = vld [vmem:[%s1 + $0x30] sm:$0xff]
    %v100 = vld [vmem:[%s1 + $0x38] sm:$0xff]
    %v101 = vld [vmem:[%s1 + $0x40] sm:$0xff]
    %v102 = vld [vmem:[%s1 + $0x48] sm:$0xff]
    %v103 = vld [vmem:[%s1 + $0x50] sm:$0xff]
    %v104 = vld [vmem:[%s1 + $0x58] sm:$0xff]
    %v105 = vld [vmem:[%s1 + $0x60] sm:$0xff]
    %v106 = vld [vmem:[%s1 + $0x68] sm:$0xff]
    %v107 = vld [vmem:[%s1 + $0x70] sm:$0xff]
    %v108 = vld [vmem:[%s1 + $0x78] sm:$0xff]
    %v109 = vpack.c.bf16 %v94, %v93
    %v110 = vpack.c.bf16 %v96, %v95
    %v111 = vpack.c.bf16 %v98, %v97
    %v112 = vpack.c.bf16 %v100, %v99
    %v113 = vpack.c.bf16 %v102, %v101
    %v114 = vpack.c.bf16 %v104, %v103
    %v115 = vpack.c.bf16 %v106, %v105
    %v116 = vpack.c.bf16 %v108, %v107
    %s117 = smul.u32 4, 16
    %s118 = smul.u32 %s117, 1
    %s119 = sshll.u32 %s118, 4
    %120 = dma.done [#allocation4], %s119
    %v121 = vld [vmem:[#allocation2] sm:$0xf]
    %v122 = vld [vmem:[#allocation2 + $0x4] sm:$0xf]
    %v123 = vld [vmem:[#allocation2 + $0x8] sm:$0xf]
    %v124 = vld [vmem:[#allocation2 + $0xc] sm:$0xf]
    %v125 = vld [vmem:[#allocation2 + $0x10] sm:$0xf]
    %v126 = vld [vmem:[#allocation2 + $0x14] sm:$0xf]
    %v127 = vld [vmem:[#allocation2 + $0x18] sm:$0xf]
    %v128 = vld [vmem:[#allocation2 + $0x1c] sm:$0xf]
    %v129 = vld [vmem:[#allocation2 + $0x20] sm:$0xf]
    %v130 = vld [vmem:[#allocation2 + $0x24] sm:$0xf]
    %v131 = vld [vmem:[#allocation2 + $0x28] sm:$0xf]
    %v132 = vld [vmem:[#allocation2 + $0x2c] sm:$0xf]
    %v133 = vld [vmem:[#allocation2 + $0x30] sm:$0xf]
    %v134 = vld [vmem:[#allocation2 + $0x34] sm:$0xf]
    %v135 = vld [vmem:[#allocation2 + $0x38] sm:$0xf]
    %v136 = vld [vmem:[#allocation2 + $0x3c] sm:$0xf]
    %v153 = vunpack.c.l.b16 %v121
    %v154 = vunpack.c.l.b16 %v122
    %v155 = vunpack.c.l.b16 %v123
    %v156 = vunpack.c.l.b16 %v124
    %v157 = vunpack.c.l.b16 %v125
    %v158 = vunpack.c.l.b16 %v126
    %v159 = vunpack.c.l.b16 %v127
    %v160 = vunpack.c.l.b16 %v128
    %v161 = vunpack.c.l.b16 %v129
    %v162 = vunpack.c.l.b16 %v130
    %v163 = vunpack.c.l.b16 %v131
    %v164 = vunpack.c.l.b16 %v132
    %v165 = vunpack.c.l.b16 %v133
    %v166 = vunpack.c.l.b16 %v134
    %v167 = vunpack.c.l.b16 %v135
    %v168 = vunpack.c.l.b16 %v136
    %v169 = vpack.c.b16 %v154, %v153
    %v170 = vpack.c.b16 %v156, %v155
    %v171 = vpack.c.b16 %v158, %v157
    %v172 = vpack.c.b16 %v160, %v159
    %v173 = vpack.c.b16 %v162, %v161
    %v174 = vpack.c.b16 %v164, %v163
    %v175 = vpack.c.b16 %v166, %v165
    %v176 = vpack.c.b16 %v168, %v167
    %185 = vmatpush.bf16.msra.mxu0 %v116
    %186 = vmatpush.bf16.msra.mxu0 %v115
    %187 = vmatpush.bf16.msra.mxu0 %v114
    %188 = vmatpush.bf16.msra.mxu0 %v113
    %189 = vmatpush.bf16.msra.mxu0 %v112
    %190 = vmatpush.bf16.msra.mxu0 %v111
    %191 = vmatpush.bf16.msra.mxu0 %v110
    %192 = vmatpush.bf16.msra.mxu0 %v109
    %193 = vmatmul.bf16.gmra.mxu0 %v169
    %v194 = vpop.f32.mrf.mxu0
    %v195 = vadd.f32 0.0, %v194
    %v196 = vpop.f32.mrf.mxu0
    %v197 = vadd.f32 0.0, %v196
    %198 = vmatmul.bf16.gmra.mxu0 %v170
    %v199 = vpop.f32.mrf.mxu0
    %v200 = vadd.f32 0.0, %v199
    %v201 = vpop.f32.mrf.mxu0
    %v202 = vadd.f32 0.0, %v201
    %203 = vmatmul.bf16.gmra.mxu0 %v171
    %v204 = vpop.f32.mrf.mxu0
    %v205 = vadd.f32 0.0, %v204
    %v206 = vpop.f32.mrf.mxu0
    %v207 = vadd.f32 0.0, %v206
    %208 = vmatmul.bf16.gmra.mxu0 %v172
    %v209 = vpop.f32.mrf.mxu0
    %v210 = vadd.f32 0.0, %v209
    %v211 = vpop.f32.mrf.mxu0
    %v212 = vadd.f32 0.0, %v211
    %213 = vmatmul.bf16.gmra.mxu0 %v173
    %v214 = vpop.f32.mrf.mxu0
    %v215 = vadd.f32 0.0, %v214
    %v216 = vpop.f32.mrf.mxu0
    %v217 = vadd.f32 0.0, %v216
    %218 = vmatmul.bf16.gmra.mxu0 %v174
    %v219 = vpop.f32.mrf.mxu0
    %v220 = vadd.f32 0.0, %v219
    %v221 = vpop.f32.mrf.mxu0
    %v222 = vadd.f32 0.0, %v221
    %223 = vmatmul.bf16.gmra.mxu0 %v175
    %v224 = vpop.f32.mrf.mxu0
    %v225 = vadd.f32 0.0, %v224
    %v226 = vpop.f32.mrf.mxu0
    %v227 = vadd.f32 0.0, %v226
    %228 = vmatmul.bf16.gmra.mxu0 %v176
    %v229 = vpop.f32.mrf.mxu0
    %v230 = vadd.f32 0.0, %v229
    %v231 = vpop.f32.mrf.mxu0
    %v232 = vadd.f32 0.0, %v231
    %233 = vdwg.mxu0
    %234 = vst [vmem:[#allocation3] sm:$0xff] %v195
    %235 = vst [vmem:[#allocation3 + $0x8] sm:$0xff] %v197
    %236 = vst [vmem:[#allocation3 + $0x10] sm:$0xff] %v200
    %237 = vst [vmem:[#allocation3 + $0x18] sm:$0xff] %v202
    %238 = vst [vmem:[#allocation3 + $0x20] sm:$0xff] %v205
    %239 = vst [vmem:[#allocation3 + $0x28] sm:$0xff] %v207
    %240 = vst [vmem:[#allocation3 + $0x30] sm:$0xff] %v210
    %241 = vst [vmem:[#allocation3 + $0x38] sm:$0xff] %v212
    %242 = vst [vmem:[#allocation3 + $0x40] sm:$0xff] %v215
    %243 = vst [vmem:[#allocation3 + $0x48] sm:$0xff] %v217
    %244 = vst [vmem:[#allocation3 + $0x50] sm:$0xff] %v220
    %245 = vst [vmem:[#allocation3 + $0x58] sm:$0xff] %v222
    %246 = vst [vmem:[#allocation3 + $0x60] sm:$0xff] %v225
    %247 = vst [vmem:[#allocation3 + $0x68] sm:$0xff] %v227
    %248 = vst [vmem:[#allocation3 + $0x70] sm:$0xff] %v230
    %249 = vst [vmem:[#allocation3 + $0x78] sm:$0xff] %v232
    %v250 = vld [vmem:[#allocation3] sm:$0xff]
    %v251 = vld [vmem:[#allocation3 + $0x8] sm:$0xff]
    %v252 = vld [vmem:[#allocation3 + $0x10] sm:$0xff]
    %v253 = vld [vmem:[#allocation3 + $0x18] sm:$0xff]
    %v254 = vld [vmem:[#allocation3 + $0x20] sm:$0xff]
    %v255 = vld [vmem:[#allocation3 + $0x28] sm:$0xff]
    %v256 = vld [vmem:[#allocation3 + $0x30] sm:$0xff]
    %v257 = vld [vmem:[#allocation3 + $0x38] sm:$0xff]
    %v258 = vld [vmem:[#allocation3 + $0x40] sm:$0xff]
    %v259 = vld [vmem:[#allocation3 + $0x48] sm:$0xff]
    %v260 = vld [vmem:[#allocation3 + $0x50] sm:$0xff]
    %v261 = vld [vmem:[#allocation3 + $0x58] sm:$0xff]
    %v262 = vld [vmem:[#allocation3 + $0x60] sm:$0xff]
    %v263 = vld [vmem:[#allocation3 + $0x68] sm:$0xff]
    %v264 = vld [vmem:[#allocation3 + $0x70] sm:$0xff]
    %v265 = vld [vmem:[#allocation3 + $0x78] sm:$0xff]
    %s266 = sld [smem:[#allocation5]]
    %v267 = vstv %s266
    %v268 = vmul.f32 %v267, %v93
    %v269 = vmul.f32 %v267, %v94
    %v270 = vmul.f32 %v267, %v95
    %v271 = vmul.f32 %v267, %v96
    %v272 = vmul.f32 %v267, %v97
    %v273 = vmul.f32 %v267, %v98
    %v274 = vmul.f32 %v267, %v99
    %v275 = vmul.f32 %v267, %v100
    %v276 = vmul.f32 %v267, %v101
    %v277 = vmul.f32 %v267, %v102
    %v278 = vmul.f32 %v267, %v103
    %v279 = vmul.f32 %v267, %v104
    %v280 = vmul.f32 %v267, %v105
    %v281 = vmul.f32 %v267, %v106
    %v282 = vmul.f32 %v267, %v107
    %v283 = vmul.f32 %v267, %v108
    %v284 = vadd.f32 %v268, %v250
    %v285 = vadd.f32 %v269, %v251
    %v286 = vadd.f32 %v270, %v252
    %v287 = vadd.f32 %v271, %v253
    %v288 = vadd.f32 %v272, %v254
    %v289 = vadd.f32 %v273, %v255
    %v290 = vadd.f32 %v274, %v256
    %v291 = vadd.f32 %v275, %v257
    %v292 = vadd.f32 %v276, %v258
    %v293 = vadd.f32 %v277, %v259
    %v294 = vadd.f32 %v278, %v260
    %v295 = vadd.f32 %v279, %v261
    %v296 = vadd.f32 %v280, %v262
    %v297 = vadd.f32 %v281, %v263
    %v298 = vadd.f32 %v282, %v264
    %v299 = vadd.f32 %v283, %v265
    %v300 = vpack.c.bf16 %v285, %v284
    %v301 = vpack.c.bf16 %v287, %v286
    %v302 = vpack.c.bf16 %v289, %v288
    %v303 = vpack.c.bf16 %v291, %v290
    %v304 = vpack.c.bf16 %v293, %v292
    %v305 = vpack.c.bf16 %v295, %v294
    %v306 = vpack.c.bf16 %v297, %v296
    %v307 = vpack.c.bf16 %v299, %v298
    %v308 = vld [vmem:[%s4] sm:$0xf]
    %v309 = vld [vmem:[%s4 + $0x4] sm:$0xf]
    %v310 = vld [vmem:[%s4 + $0x8] sm:$0xf]
    %v311 = vld [vmem:[%s4 + $0xc] sm:$0xf]
    %v312 = vld [vmem:[%s4 + $0x10] sm:$0xf]
    %v313 = vld [vmem:[%s4 + $0x14] sm:$0xf]
    %v314 = vld [vmem:[%s4 + $0x18] sm:$0xf]
    %v315 = vld [vmem:[%s4 + $0x1c] sm:$0xf]
    %v316 = vld [vmem:[%s4 + $0x20] sm:$0xf]
    %v317 = vld [vmem:[%s4 + $0x24] sm:$0xf]
    %v318 = vld [vmem:[%s4 + $0x28] sm:$0xf]
    %v319 = vld [vmem:[%s4 + $0x2c] sm:$0xf]
    %v320 = vld [vmem:[%s4 + $0x30] sm:$0xf]
    %v321 = vld [vmem:[%s4 + $0x34] sm:$0xf]
    %v322 = vld [vmem:[%s4 + $0x38] sm:$0xf]
    %v323 = vld [vmem:[%s4 + $0x3c] sm:$0xf]
    %v340 = vunpack.c.l.b16 %v308
    %v341 = vunpack.c.l.b16 %v309
    %v342 = vunpack.c.l.b16 %v310
    %v343 = vunpack.c.l.b16 %v311
    %v344 = vunpack.c.l.b16 %v312
    %v345 = vunpack.c.l.b16 %v313
    %v346 = vunpack.c.l.b16 %v314
    %v347 = vunpack.c.l.b16 %v315
    %v348 = vunpack.c.l.b16 %v316
    %v349 = vunpack.c.l.b16 %v317
    %v350 = vunpack.c.l.b16 %v318
    %v351 = vunpack.c.l.b16 %v319
    %v352 = vunpack.c.l.b16 %v320
    %v353 = vunpack.c.l.b16 %v321
    %v354 = vunpack.c.l.b16 %v322
    %v355 = vunpack.c.l.b16 %v323
    %v356 = vpack.c.b16 %v341, %v340
    %v357 = vpack.c.b16 %v343, %v342
    %v358 = vpack.c.b16 %v345, %v344
    %v359 = vpack.c.b16 %v347, %v346
    %v360 = vpack.c.b16 %v349, %v348
    %v361 = vpack.c.b16 %v351, %v350
    %v362 = vpack.c.b16 %v353, %v352
    %v363 = vpack.c.b16 %v355, %v354
    %372 = vmatpush.bf16.msra.mxu0 %v363
    %373 = vmatpush.bf16.msra.mxu0 %v362
    %374 = vmatpush.bf16.msra.mxu0 %v361
    %375 = vmatpush.bf16.msra.mxu0 %v360
    %376 = vmatpush.bf16.msra.mxu0 %v359
    %377 = vmatpush.bf16.msra.mxu0 %v358
    %378 = vmatpush.bf16.msra.mxu0 %v357
    %379 = vmatpush.bf16.msra.mxu0 %v356
    %380 = vmatmul.bf16.gmra.mxu0 %v300
    %v381 = vpop.f32.mrf.mxu0
    %v382 = vadd.f32 0.0, %v381
    %v383 = vpop.f32.mrf.mxu0
    %v384 = vadd.f32 0.0, %v383
    %385 = vmatmul.bf16.gmra.mxu0 %v301
    %v386 = vpop.f32.mrf.mxu0
    %v387 = vadd.f32 0.0, %v386
    %v388 = vpop.f32.mrf.mxu0
    %v389 = vadd.f32 0.0, %v388
    %390 = vmatmul.bf16.gmra.mxu0 %v302
    %v391 = vpop.f32.mrf.mxu0
    %v392 = vadd.f32 0.0, %v391
    %v393 = vpop.f32.mrf.mxu0
    %v394 = vadd.f32 0.0, %v393
    %395 = vmatmul.bf16.gmra.mxu0 %v303
    %v396 = vpop.f32.mrf.mxu0
    %v397 = vadd.f32 0.0, %v396
    %v398 = vpop.f32.mrf.mxu0
    %v399 = vadd.f32 0.0, %v398
    %400 = vmatmul.bf16.gmra.mxu0 %v304
    %v401 = vpop.f32.mrf.mxu0
    %v402 = vadd.f32 0.0, %v401
    %v403 = vpop.f32.mrf.mxu0
    %v404 = vadd.f32 0.0, %v403
    %405 = vmatmul.bf16.gmra.mxu0 %v305
    %v406 = vpop.f32.mrf.mxu0
    %v407 = vadd.f32 0.0, %v406
    %v408 = vpop.f32.mrf.mxu0
    %v409 = vadd.f32 0.0, %v408
    %410 = vmatmul.bf16.gmra.mxu0 %v306
    %v411 = vpop.f32.mrf.mxu0
    %v412 = vadd.f32 0.0, %v411
    %v413 = vpop.f32.mrf.mxu0
    %v414 = vadd.f32 0.0, %v413
    %415 = vmatmul.bf16.gmra.mxu0 %v307
    %v416 = vpop.f32.mrf.mxu0
    %v417 = vadd.f32 0.0, %v416
    %v418 = vpop.f32.mrf.mxu0
    %v419 = vadd.f32 0.0, %v418
    %420 = vdwg.mxu0
    %v421 = vld [vmem:[%s5] sm:$0x1]
    %v423 = vperm.slane %v421, 0
    %v425 = vmul.f32 %v382, %v423
    %v426 = vmul.f32 %v384, %v423
    %v427 = vmul.f32 %v387, %v423
    %v428 = vmul.f32 %v389, %v423
    %v429 = vmul.f32 %v392, %v423
    %v430 = vmul.f32 %v394, %v423
    %v431 = vmul.f32 %v397, %v423
    %v432 = vmul.f32 %v399, %v423
    %v433 = vmul.f32 %v402, %v423
    %v434 = vmul.f32 %v404, %v423
    %v435 = vmul.f32 %v407, %v423
    %v436 = vmul.f32 %v409, %v423
    %v437 = vmul.f32 %v412, %v423
    %v438 = vmul.f32 %v414, %v423
    %v439 = vmul.f32 %v417, %v423
    %v440 = vmul.f32 %v419, %v423
    %v441 = vld [vmem:[%s6] sm:$0x1]
    %v443 = vperm.slane %v441, 0
    %v445 = vadd.f32 %v425, %v443
    %v446 = vadd.f32 %v426, %v443
    %v447 = vadd.f32 %v427, %v443
    %v448 = vadd.f32 %v428, %v443
    %v449 = vadd.f32 %v429, %v443
    %v450 = vadd.f32 %v430, %v443
    %v451 = vadd.f32 %v431, %v443
    %v452 = vadd.f32 %v432, %v443
    %v453 = vadd.f32 %v433, %v443
    %v454 = vadd.f32 %v434, %v443
    %v455 = vadd.f32 %v435, %v443
    %v456 = vadd.f32 %v436, %v443
    %v457 = vadd.f32 %v437, %v443
    %v458 = vadd.f32 %v438, %v443
    %v459 = vadd.f32 %v439, %v443
    %v460 = vadd.f32 %v440, %v443
    %vm461 = vcmp.gt.f32.partialorder %v445, 0.0
    %vm462 = vcmp.gt.f32.partialorder %v446, 0.0
    %vm463 = vcmp.gt.f32.partialorder %v447, 0.0
    %vm464 = vcmp.gt.f32.partialorder %v448, 0.0
    %vm465 = vcmp.gt.f32.partialorder %v449, 0.0
    %vm466 = vcmp.gt.f32.partialorder %v450, 0.0
    %vm467 = vcmp.gt.f32.partialorder %v451, 0.0
    %vm468 = vcmp.gt.f32.partialorder %v452, 0.0
    %vm469 = vcmp.gt.f32.partialorder %v453, 0.0
    %vm470 = vcmp.gt.f32.partialorder %v454, 0.0
    %vm471 = vcmp.gt.f32.partialorder %v455, 0.0
    %vm472 = vcmp.gt.f32.partialorder %v456, 0.0
    %vm473 = vcmp.gt.f32.partialorder %v457, 0.0
    %vm474 = vcmp.gt.f32.partialorder %v458, 0.0
    %vm475 = vcmp.gt.f32.partialorder %v459, 0.0
    %vm476 = vcmp.gt.f32.partialorder %v460, 0.0
    %v477 = vmul.f32 %v445, 0.01
    %v478 = vmul.f32 %v446, 0.01
    %v479 = vmul.f32 %v447, 0.01
    %v480 = vmul.f32 %v448, 0.01
    %v481 = vmul.f32 %v449, 0.01
    %v482 = vmul.f32 %v450, 0.01
    %v483 = vmul.f32 %v451, 0.01
    %v484 = vmul.f32 %v452, 0.01
    %v485 = vmul.f32 %v453, 0.01
    %v486 = vmul.f32 %v454, 0.01
    %v487 = vmul.f32 %v455, 0.01
    %v488 = vmul.f32 %v456, 0.01
    %v489 = vmul.f32 %v457, 0.01
    %v490 = vmul.f32 %v458, 0.01
    %v491 = vmul.f32 %v459, 0.01
    %v492 = vmul.f32 %v460, 0.01
    %v493 = vsel %vm461, %v445, %v477
    %v494 = vsel %vm462, %v446, %v478
    %v495 = vsel %vm463, %v447, %v479
    %v496 = vsel %vm464, %v448, %v480
    %v497 = vsel %vm465, %v449, %v481
    %v498 = vsel %vm466, %v450, %v482
    %v499 = vsel %vm467, %v451, %v483
    %v500 = vsel %vm468, %v452, %v484
    %v501 = vsel %vm469, %v453, %v485
    %v502 = vsel %vm470, %v454, %v486
    %v503 = vsel %vm471, %v455, %v487
    %v504 = vsel %vm472, %v456, %v488
    %v505 = vsel %vm473, %v457, %v489
    %v506 = vsel %vm474, %v458, %v490
    %v507 = vsel %vm475, %v459, %v491
    %v508 = vsel %vm476, %v460, %v492
    %v509 = vpack.c.bf16 %v494, %v493
    %v510 = vpack.c.bf16 %v496, %v495
    %v511 = vpack.c.bf16 %v498, %v497
    %v512 = vpack.c.bf16 %v500, %v499
    %v513 = vpack.c.bf16 %v502, %v501
    %v514 = vpack.c.bf16 %v504, %v503
    %v515 = vpack.c.bf16 %v506, %v505
    %v516 = vpack.c.bf16 %v508, %v507
    %v517 = vld [vmem:[%s7] sm:$0xf]
    %v518 = vld [vmem:[%s7 + $0x4] sm:$0xf]
    %v519 = vld [vmem:[%s7 + $0x8] sm:$0xf]
    %v520 = vld [vmem:[%s7 + $0xc] sm:$0xf]
    %v521 = vld [vmem:[%s7 + $0x10] sm:$0xf]
    %v522 = vld [vmem:[%s7 + $0x14] sm:$0xf]
    %v523 = vld [vmem:[%s7 + $0x18] sm:$0xf]
    %v524 = vld [vmem:[%s7 + $0x1c] sm:$0xf]
    %v525 = vld [vmem:[%s7 + $0x20] sm:$0xf]
    %v526 = vld [vmem:[%s7 + $0x24] sm:$0xf]
    %v527 = vld [vmem:[%s7 + $0x28] sm:$0xf]
    %v528 = vld [vmem:[%s7 + $0x2c] sm:$0xf]
    %v529 = vld [vmem:[%s7 + $0x30] sm:$0xf]
    %v530 = vld [vmem:[%s7 + $0x34] sm:$0xf]
    %v531 = vld [vmem:[%s7 + $0x38] sm:$0xf]
    %v532 = vld [vmem:[%s7 + $0x3c] sm:$0xf]
    %v549 = vunpack.c.l.b16 %v517
    %v550 = vunpack.c.l.b16 %v518
    %v551 = vunpack.c.l.b16 %v519
    %v552 = vunpack.c.l.b16 %v520
    %v553 = vunpack.c.l.b16 %v521
    %v554 = vunpack.c.l.b16 %v522
    %v555 = vunpack.c.l.b16 %v523
    %v556 = vunpack.c.l.b16 %v524
    %v557 = vunpack.c.l.b16 %v525
    %v558 = vunpack.c.l.b16 %v526
    %v559 = vunpack.c.l.b16 %v527
    %v560 = vunpack.c.l.b16 %v528
    %v561 = vunpack.c.l.b16 %v529
    %v562 = vunpack.c.l.b16 %v530
    %v563 = vunpack.c.l.b16 %v531
    %v564 = vunpack.c.l.b16 %v532
    %v565 = vpack.c.b16 %v550, %v549
    %v566 = vpack.c.b16 %v552, %v551
    %v567 = vpack.c.b16 %v554, %v553
    %v568 = vpack.c.b16 %v556, %v555
    %v569 = vpack.c.b16 %v558, %v557
    %v570 = vpack.c.b16 %v560, %v559
    %v571 = vpack.c.b16 %v562, %v561
    %v572 = vpack.c.b16 %v564, %v563
    %581 = vmatpush.bf16.msra.mxu0 %v572
    %582 = vmatpush.bf16.msra.mxu0 %v571
    %583 = vmatpush.bf16.msra.mxu0 %v570
    %584 = vmatpush.bf16.msra.mxu0 %v569
    %585 = vmatpush.bf16.msra.mxu0 %v568
    %586 = vmatpush.bf16.msra.mxu0 %v567
    %587 = vmatpush.bf16.msra.mxu0 %v566
    %588 = vmatpush.bf16.msra.mxu0 %v565
    %589 = vmatmul.bf16.gmra.mxu0 %v509
    %v590 = vpop.f32.mrf.mxu0
    %v591 = vadd.f32 0.0, %v590
    %v592 = vpop.f32.mrf.mxu0
    %v593 = vadd.f32 0.0, %v592
    %594 = vmatmul.bf16.gmra.mxu0 %v510
    %v595 = vpop.f32.mrf.mxu0
    %v596 = vadd.f32 0.0, %v595
    %v597 = vpop.f32.mrf.mxu0
    %v598 = vadd.f32 0.0, %v597
    %599 = vmatmul.bf16.gmra.mxu0 %v511
    %v600 = vpop.f32.mrf.mxu0
    %v601 = vadd.f32 0.0, %v600
    %v602 = vpop.f32.mrf.mxu0
    %v603 = vadd.f32 0.0, %v602
    %604 = vmatmul.bf16.gmra.mxu0 %v512
    %v605 = vpop.f32.mrf.mxu0
    %v606 = vadd.f32 0.0, %v605
    %v607 = vpop.f32.mrf.mxu0
    %v608 = vadd.f32 0.0, %v607
    %609 = vmatmul.bf16.gmra.mxu0 %v513
    %v610 = vpop.f32.mrf.mxu0
    %v611 = vadd.f32 0.0, %v610
    %v612 = vpop.f32.mrf.mxu0
    %v613 = vadd.f32 0.0, %v612
    %614 = vmatmul.bf16.gmra.mxu0 %v514
    %v615 = vpop.f32.mrf.mxu0
    %v616 = vadd.f32 0.0, %v615
    %v617 = vpop.f32.mrf.mxu0
    %v618 = vadd.f32 0.0, %v617
    %619 = vmatmul.bf16.gmra.mxu0 %v515
    %v620 = vpop.f32.mrf.mxu0
    %v621 = vadd.f32 0.0, %v620
    %v622 = vpop.f32.mrf.mxu0
    %v623 = vadd.f32 0.0, %v622
    %624 = vmatmul.bf16.gmra.mxu0 %v516
    %v625 = vpop.f32.mrf.mxu0
    %v626 = vadd.f32 0.0, %v625
    %v627 = vpop.f32.mrf.mxu0
    %v628 = vadd.f32 0.0, %v627
    %629 = vdwg.mxu0
    %v630 = vld [vmem:[%s8] sm:$0x1]
    %v632 = vperm.slane %v630, 0
    %v634 = vmul.f32 %v591, %v632
    %v635 = vmul.f32 %v593, %v632
    %v636 = vmul.f32 %v596, %v632
    %v637 = vmul.f32 %v598, %v632
    %v638 = vmul.f32 %v601, %v632
    %v639 = vmul.f32 %v603, %v632
    %v640 = vmul.f32 %v606, %v632
    %v641 = vmul.f32 %v608, %v632
    %v642 = vmul.f32 %v611, %v632
    %v643 = vmul.f32 %v613, %v632
    %v644 = vmul.f32 %v616, %v632
    %v645 = vmul.f32 %v618, %v632
    %v646 = vmul.f32 %v621, %v632
    %v647 = vmul.f32 %v623, %v632
    %v648 = vmul.f32 %v626, %v632
    %v649 = vmul.f32 %v628, %v632
    %v650 = vld [vmem:[%s9] sm:$0x1]
    %v652 = vperm.slane %v650, 0
    %v654 = vadd.f32 %v634, %v652
    %v655 = vadd.f32 %v635, %v652
    %v656 = vadd.f32 %v636, %v652
    %v657 = vadd.f32 %v637, %v652
    %v658 = vadd.f32 %v638, %v652
    %v659 = vadd.f32 %v639, %v652
    %v660 = vadd.f32 %v640, %v652
    %v661 = vadd.f32 %v641, %v652
    %v662 = vadd.f32 %v642, %v652
    %v663 = vadd.f32 %v643, %v652
    %v664 = vadd.f32 %v644, %v652
    %v665 = vadd.f32 %v645, %v652
    %v666 = vadd.f32 %v646, %v652
    %v667 = vadd.f32 %v647, %v652
    %v668 = vadd.f32 %v648, %v652
    %v669 = vadd.f32 %v649, %v652
    %v670 = vmax.f32 %v654, 0.0
    %v671 = vmax.f32 %v655, 0.0
    %v672 = vmax.f32 %v656, 0.0
    %v673 = vmax.f32 %v657, 0.0
    %v674 = vmax.f32 %v658, 0.0
    %v675 = vmax.f32 %v659, 0.0
    %v676 = vmax.f32 %v660, 0.0
    %v677 = vmax.f32 %v661, 0.0
    %v678 = vmax.f32 %v662, 0.0
    %v679 = vmax.f32 %v663, 0.0
    %v680 = vmax.f32 %v664, 0.0
    %v681 = vmax.f32 %v665, 0.0
    %v682 = vmax.f32 %v666, 0.0
    %v683 = vmax.f32 %v667, 0.0
    %v684 = vmax.f32 %v668, 0.0
    %v685 = vmax.f32 %v669, 0.0
    %v686 = vpack.c.bf16 %v671, %v670
    %v687 = vpack.c.bf16 %v673, %v672
    %v688 = vpack.c.bf16 %v675, %v674
    %v689 = vpack.c.bf16 %v677, %v676
    %v690 = vpack.c.bf16 %v679, %v678
    %v691 = vpack.c.bf16 %v681, %v680
    %v692 = vpack.c.bf16 %v683, %v682
    %v693 = vpack.c.bf16 %v685, %v684
    %v694 = vld [vmem:[#allocation2] sm:$0xf]
    %v695 = vld [vmem:[#allocation2 + $0x4] sm:$0xf]
    %v696 = vld [vmem:[#allocation2 + $0x8] sm:$0xf]
    %v697 = vld [vmem:[#allocation2 + $0xc] sm:$0xf]
    %v698 = vld [vmem:[#allocation2 + $0x10] sm:$0xf]
    %v699 = vld [vmem:[#allocation2 + $0x14] sm:$0xf]
    %v700 = vld [vmem:[#allocation2 + $0x18] sm:$0xf]
    %v701 = vld [vmem:[#allocation2 + $0x1c] sm:$0xf]
    %v702 = vld [vmem:[#allocation2 + $0x20] sm:$0xf]
    %v703 = vld [vmem:[#allocation2 + $0x24] sm:$0xf]
    %v704 = vld [vmem:[#allocation2 + $0x28] sm:$0xf]
    %v705 = vld [vmem:[#allocation2 + $0x2c] sm:$0xf]
    %v706 = vld [vmem:[#allocation2 + $0x30] sm:$0xf]
    %v707 = vld [vmem:[#allocation2 + $0x34] sm:$0xf]
    %v708 = vld [vmem:[#allocation2 + $0x38] sm:$0xf]
    %v709 = vld [vmem:[#allocation2 + $0x3c] sm:$0xf]
    %v726 = vunpack.c.l.b16 %v694
    %v727 = vunpack.c.l.b16 %v695
    %v728 = vunpack.c.l.b16 %v696
    %v729 = vunpack.c.l.b16 %v697
    %v730 = vunpack.c.l.b16 %v698
    %v731 = vunpack.c.l.b16 %v699
    %v732 = vunpack.c.l.b16 %v700
    %v733 = vunpack.c.l.b16 %v701
    %v734 = vunpack.c.l.b16 %v702
    %v735 = vunpack.c.l.b16 %v703
    %v736 = vunpack.c.l.b16 %v704
    %v737 = vunpack.c.l.b16 %v705
    %v738 = vunpack.c.l.b16 %v706
    %v739 = vunpack.c.l.b16 %v707
    %v740 = vunpack.c.l.b16 %v708
    %v741 = vunpack.c.l.b16 %v709
    %v742 = vpack.c.b16 %v727, %v726
    %v743 = vpack.c.b16 %v729, %v728
    %v744 = vpack.c.b16 %v731, %v730
    %v745 = vpack.c.b16 %v733, %v732
    %v746 = vpack.c.b16 %v735, %v734
    %v747 = vpack.c.b16 %v737, %v736
    %v748 = vpack.c.b16 %v739, %v738
    %v749 = vpack.c.b16 %v741, %v740
    %758 = vmatpush.bf16.msra.mxu0 %v693
    %759 = vmatpush.bf16.msra.mxu0 %v692
    %760 = vmatpush.bf16.msra.mxu0 %v691
    %761 = vmatpush.bf16.msra.mxu0 %v690
    %762 = vmatpush.bf16.msra.mxu0 %v689
    %763 = vmatpush.bf16.msra.mxu0 %v688
    %764 = vmatpush.bf16.msra.mxu0 %v687
    %765 = vmatpush.bf16.msra.mxu0 %v686
    %766 = vmatmul.bf16.gmra.mxu0 %v742
    %v767 = vpop.f32.mrf.mxu0
    %v768 = vadd.f32 0.0, %v767
    %v769 = vpop.f32.mrf.mxu0
    %v770 = vadd.f32 0.0, %v769
    %771 = vmatmul.bf16.gmra.mxu0 %v743
    %v772 = vpop.f32.mrf.mxu0
    %v773 = vadd.f32 0.0, %v772
    %v774 = vpop.f32.mrf.mxu0
    %v775 = vadd.f32 0.0, %v774
    %776 = vmatmul.bf16.gmra.mxu0 %v744
    %v777 = vpop.f32.mrf.mxu0
    %v778 = vadd.f32 0.0, %v777
    %v779 = vpop.f32.mrf.mxu0
    %v780 = vadd.f32 0.0, %v779
    %781 = vmatmul.bf16.gmra.mxu0 %v745
    %v782 = vpop.f32.mrf.mxu0
    %v783 = vadd.f32 0.0, %v782
    %v784 = vpop.f32.mrf.mxu0
    %v785 = vadd.f32 0.0, %v784
    %786 = vmatmul.bf16.gmra.mxu0 %v746
    %v787 = vpop.f32.mrf.mxu0
    %v788 = vadd.f32 0.0, %v787
    %v789 = vpop.f32.mrf.mxu0
    %v790 = vadd.f32 0.0, %v789
    %791 = vmatmul.bf16.gmra.mxu0 %v747
    %v792 = vpop.f32.mrf.mxu0
    %v793 = vadd.f32 0.0, %v792
    %v794 = vpop.f32.mrf.mxu0
    %v795 = vadd.f32 0.0, %v794
    %796 = vmatmul.bf16.gmra.mxu0 %v748
    %v797 = vpop.f32.mrf.mxu0
    %v798 = vadd.f32 0.0, %v797
    %v799 = vpop.f32.mrf.mxu0
    %v800 = vadd.f32 0.0, %v799
    %801 = vmatmul.bf16.gmra.mxu0 %v749
    %v802 = vpop.f32.mrf.mxu0
    %v803 = vadd.f32 0.0, %v802
    %v804 = vpop.f32.mrf.mxu0
    %v805 = vadd.f32 0.0, %v804
    %806 = vdwg.mxu0
    %s807 = sld [smem:[#allocation5 + $0x1]]
    %v808 = vstv %s807
    %v809 = vmul.f32 %v808, %v670
    %v810 = vmul.f32 %v808, %v671
    %v811 = vmul.f32 %v808, %v672
    %v812 = vmul.f32 %v808, %v673
    %v813 = vmul.f32 %v808, %v674
    %v814 = vmul.f32 %v808, %v675
    %v815 = vmul.f32 %v808, %v676
    %v816 = vmul.f32 %v808, %v677
    %v817 = vmul.f32 %v808, %v678
    %v818 = vmul.f32 %v808, %v679
    %v819 = vmul.f32 %v808, %v680
    %v820 = vmul.f32 %v808, %v681
    %v821 = vmul.f32 %v808, %v682
    %v822 = vmul.f32 %v808, %v683
    %v823 = vmul.f32 %v808, %v684
    %v824 = vmul.f32 %v808, %v685
    %v825 = vadd.f32 %v809, %v768
    %v826 = vadd.f32 %v810, %v770
    %v827 = vadd.f32 %v811, %v773
    %v828 = vadd.f32 %v812, %v775
    %v829 = vadd.f32 %v813, %v778
    %v830 = vadd.f32 %v814, %v780
    %v831 = vadd.f32 %v815, %v783
    %v832 = vadd.f32 %v816, %v785
    %v833 = vadd.f32 %v817, %v788
    %v834 = vadd.f32 %v818, %v790
    %v835 = vadd.f32 %v819, %v793
    %v836 = vadd.f32 %v820, %v795
    %v837 = vadd.f32 %v821, %v798
    %v838 = vadd.f32 %v822, %v800
    %v839 = vadd.f32 %v823, %v803
    %v840 = vadd.f32 %v824, %v805
    %v841 = vpack.c.bf16 %v826, %v825
    %v842 = vpack.c.bf16 %v828, %v827
    %v843 = vpack.c.bf16 %v830, %v829
    %v844 = vpack.c.bf16 %v832, %v831
    %v845 = vpack.c.bf16 %v834, %v833
    %v846 = vpack.c.bf16 %v836, %v835
    %v847 = vpack.c.bf16 %v838, %v837
    %v848 = vpack.c.bf16 %v840, %v839
    %s849 = scalar_lea.vmem %s4, 64
    %v850 = vld [vmem:[%s849] sm:$0xf]
    %v851 = vld [vmem:[%s849 + $0x4] sm:$0xf]
    %v852 = vld [vmem:[%s849 + $0x8] sm:$0xf]
    %v853 = vld [vmem:[%s849 + $0xc] sm:$0xf]
    %v854 = vld [vmem:[%s849 + $0x10] sm:$0xf]
    %v855 = vld [vmem:[%s849 + $0x14] sm:$0xf]
    %v856 = vld [vmem:[%s849 + $0x18] sm:$0xf]
    %v857 = vld [vmem:[%s849 + $0x1c] sm:$0xf]
    %v858 = vld [vmem:[%s849 + $0x20] sm:$0xf]
    %v859 = vld [vmem:[%s849 + $0x24] sm:$0xf]
    %v860 = vld [vmem:[%s849 + $0x28] sm:$0xf]
    %v861 = vld [vmem:[%s849 + $0x2c] sm:$0xf]
    %v862 = vld [vmem:[%s849 + $0x30] sm:$0xf]
    %v863 = vld [vmem:[%s849 + $0x34] sm:$0xf]
    %v864 = vld [vmem:[%s849 + $0x38] sm:$0xf]
    %v865 = vld [vmem:[%s849 + $0x3c] sm:$0xf]
    %v882 = vunpack.c.l.b16 %v850
    %v883 = vunpack.c.l.b16 %v851
    %v884 = vunpack.c.l.b16 %v852
    %v885 = vunpack.c.l.b16 %v853
    %v886 = vunpack.c.l.b16 %v854
    %v887 = vunpack.c.l.b16 %v855
    %v888 = vunpack.c.l.b16 %v856
    %v889 = vunpack.c.l.b16 %v857
    %v890 = vunpack.c.l.b16 %v858
    %v891 = vunpack.c.l.b16 %v859
    %v892 = vunpack.c.l.b16 %v860
    %v893 = vunpack.c.l.b16 %v861
    %v894 = vunpack.c.l.b16 %v862
    %v895 = vunpack.c.l.b16 %v863
    %v896 = vunpack.c.l.b16 %v864
    %v897 = vunpack.c.l.b16 %v865
    %v898 = vpack.c.b16 %v883, %v882
    %v899 = vpack.c.b16 %v885, %v884
    %v900 = vpack.c.b16 %v887, %v886
    %v901 = vpack.c.b16 %v889, %v888
    %v902 = vpack.c.b16 %v891, %v890
    %v903 = vpack.c.b16 %v893, %v892
    %v904 = vpack.c.b16 %v895, %v894
    %v905 = vpack.c.b16 %v897, %v896
    %914 = vmatpush.bf16.msra.mxu0 %v905
    %915 = vmatpush.bf16.msra.mxu0 %v904
    %916 = vmatpush.bf16.msra.mxu0 %v903
    %917 = vmatpush.bf16.msra.mxu0 %v902
    %918 = vmatpush.bf16.msra.mxu0 %v901
    %919 = vmatpush.bf16.msra.mxu0 %v900
    %920 = vmatpush.bf16.msra.mxu0 %v899
    %921 = vmatpush.bf16.msra.mxu0 %v898
    %922 = vmatmul.bf16.gmra.mxu0 %v841
    %v923 = vpop.f32.mrf.mxu0
    %v924 = vadd.f32 0.0, %v923
    %v925 = vpop.f32.mrf.mxu0
    %v926 = vadd.f32 0.0, %v925
    %927 = vmatmul.bf16.gmra.mxu0 %v842
    %v928 = vpop.f32.mrf.mxu0
    %v929 = vadd.f32 0.0, %v928
    %v930 = vpop.f32.mrf.mxu0
    %v931 = vadd.f32 0.0, %v930
    %932 = vmatmul.bf16.gmra.mxu0 %v843
    %v933 = vpop.f32.mrf.mxu0
    %v934 = vadd.f32 0.0, %v933
    %v935 = vpop.f32.mrf.mxu0
    %v936 = vadd.f32 0.0, %v935
    %937 = vmatmul.bf16.gmra.mxu0 %v844
    %v938 = vpop.f32.mrf.mxu0
    %v939 = vadd.f32 0.0, %v938
    %v940 = vpop.f32.mrf.mxu0
    %v941 = vadd.f32 0.0, %v940
    %942 = vmatmul.bf16.gmra.mxu0 %v845
    %v943 = vpop.f32.mrf.mxu0
    %v944 = vadd.f32 0.0, %v943
    %v945 = vpop.f32.mrf.mxu0
    %v946 = vadd.f32 0.0, %v945
    %947 = vmatmul.bf16.gmra.mxu0 %v846
    %v948 = vpop.f32.mrf.mxu0
    %v949 = vadd.f32 0.0, %v948
    %v950 = vpop.f32.mrf.mxu0
    %v951 = vadd.f32 0.0, %v950
    %952 = vmatmul.bf16.gmra.mxu0 %v847
    %v953 = vpop.f32.mrf.mxu0
    %v954 = vadd.f32 0.0, %v953
    %v955 = vpop.f32.mrf.mxu0
    %v956 = vadd.f32 0.0, %v955
    %957 = vmatmul.bf16.gmra.mxu0 %v848
    %v958 = vpop.f32.mrf.mxu0
    %v959 = vadd.f32 0.0, %v958
    %v960 = vpop.f32.mrf.mxu0
    %v961 = vadd.f32 0.0, %v960
    %962 = vdwg.mxu0
    %s963 = scalar_lea.vmem %s5, 1
    %v964 = vld [vmem:[%s963] sm:$0x1]
    %v966 = vperm.slane %v964, 0
    %v968 = vmul.f32 %v924, %v966
    %v969 = vmul.f32 %v926, %v966
    %v970 = vmul.f32 %v929, %v966
    %v971 = vmul.f32 %v931, %v966
    %v972 = vmul.f32 %v934, %v966
    %v973 = vmul.f32 %v936, %v966
    %v974 = vmul.f32 %v939, %v966
    %v975 = vmul.f32 %v941, %v966
    %v976 = vmul.f32 %v944, %v966
    %v977 = vmul.f32 %v946, %v966
    %v978 = vmul.f32 %v949, %v966
    %v979 = vmul.f32 %v951, %v966
    %v980 = vmul.f32 %v954, %v966
    %v981 = vmul.f32 %v956, %v966
    %v982 = vmul.f32 %v959, %v966
    %v983 = vmul.f32 %v961, %v966
    %s984 = scalar_lea.vmem %s6, 1
    %v985 = vld [vmem:[%s984] sm:$0x1]
    %v987 = vperm.slane %v985, 0
    %v989 = vadd.f32 %v968, %v987
    %v990 = vadd.f32 %v969, %v987
    %v991 = vadd.f32 %v970, %v987
    %v992 = vadd.f32 %v971, %v987
    %v993 = vadd.f32 %v972, %v987
    %v994 = vadd.f32 %v973, %v987
    %v995 = vadd.f32 %v974, %v987
    %v996 = vadd.f32 %v975, %v987
    %v997 = vadd.f32 %v976, %v987
    %v998 = vadd.f32 %v977, %v987
    %v999 = vadd.f32 %v978, %v987
    %v1000 = vadd.f32 %v979, %v987
    %v1001 = vadd.f32 %v980, %v987
    %v1002 = vadd.f32 %v981, %v987
    %v1003 = vadd.f32 %v982, %v987
    %v1004 = vadd.f32 %v983, %v987
    %vm1005 = vcmp.gt.f32.partialorder %v989, 0.0
    %vm1006 = vcmp.gt.f32.partialorder %v990, 0.0
    %vm1007 = vcmp.gt.f32.partialorder %v991, 0.0
    %vm1008 = vcmp.gt.f32.partialorder %v992, 0.0
    %vm1009 = vcmp.gt.f32.partialorder %v993, 0.0
    %vm1010 = vcmp.gt.f32.partialorder %v994, 0.0
    %vm1011 = vcmp.gt.f32.partialorder %v995, 0.0
    %vm1012 = vcmp.gt.f32.partialorder %v996, 0.0
    %vm1013 = vcmp.gt.f32.partialorder %v997, 0.0
    %vm1014 = vcmp.gt.f32.partialorder %v998, 0.0
    %vm1015 = vcmp.gt.f32.partialorder %v999, 0.0
    %vm1016 = vcmp.gt.f32.partialorder %v1000, 0.0
    %vm1017 = vcmp.gt.f32.partialorder %v1001, 0.0
    %vm1018 = vcmp.gt.f32.partialorder %v1002, 0.0
    %vm1019 = vcmp.gt.f32.partialorder %v1003, 0.0
    %vm1020 = vcmp.gt.f32.partialorder %v1004, 0.0
    %v1021 = vmul.f32 %v989, 0.01
    %v1022 = vmul.f32 %v990, 0.01
    %v1023 = vmul.f32 %v991, 0.01
    %v1024 = vmul.f32 %v992, 0.01
    %v1025 = vmul.f32 %v993, 0.01
    %v1026 = vmul.f32 %v994, 0.01
    %v1027 = vmul.f32 %v995, 0.01
    %v1028 = vmul.f32 %v996, 0.01
    %v1029 = vmul.f32 %v997, 0.01
    %v1030 = vmul.f32 %v998, 0.01
    %v1031 = vmul.f32 %v999, 0.01
    %v1032 = vmul.f32 %v1000, 0.01
    %v1033 = vmul.f32 %v1001, 0.01
    %v1034 = vmul.f32 %v1002, 0.01
    %v1035 = vmul.f32 %v1003, 0.01
    %v1036 = vmul.f32 %v1004, 0.01
    %v1037 = vsel %vm1005, %v989, %v1021
    %v1038 = vsel %vm1006, %v990, %v1022
    %v1039 = vsel %vm1007, %v991, %v1023
    %v1040 = vsel %vm1008, %v992, %v1024
    %v1041 = vsel %vm1009, %v993, %v1025
    %v1042 = vsel %vm1010, %v994, %v1026
    %v1043 = vsel %vm1011, %v995, %v1027
    %v1044 = vsel %vm1012, %v996, %v1028
    %v1045 = vsel %vm1013, %v997, %v1029
    %v1046 = vsel %vm1014, %v998, %v1030
    %v1047 = vsel %vm1015, %v999, %v1031
    %v1048 = vsel %vm1016, %v1000, %v1032
    %v1049 = vsel %vm1017, %v1001, %v1033
    %v1050 = vsel %vm1018, %v1002, %v1034
    %v1051 = vsel %vm1019, %v1003, %v1035
    %v1052 = vsel %vm1020, %v1004, %v1036
    %v1053 = vpack.c.bf16 %v1038, %v1037
    %v1054 = vpack.c.bf16 %v1040, %v1039
    %v1055 = vpack.c.bf16 %v1042, %v1041
    %v1056 = vpack.c.bf16 %v1044, %v1043
    %v1057 = vpack.c.bf16 %v1046, %v1045
    %v1058 = vpack.c.bf16 %v1048, %v1047
    %v1059 = vpack.c.bf16 %v1050, %v1049
    %v1060 = vpack.c.bf16 %v1052, %v1051
    %s1061 = scalar_lea.vmem %s7, 64
    %v1062 = vld [vmem:[%s1061] sm:$0xf]
    %v1063 = vld [vmem:[%s1061 + $0x4] sm:$0xf]
    %v1064 = vld [vmem:[%s1061 + $0x8] sm:$0xf]
    %v1065 = vld [vmem:[%s1061 + $0xc] sm:$0xf]
    %v1066 = vld [vmem:[%s1061 + $0x10] sm:$0xf]
    %v1067 = vld [vmem:[%s1061 + $0x14] sm:$0xf]
    %v1068 = vld [vmem:[%s1061 + $0x18] sm:$0xf]
    %v1069 = vld [vmem:[%s1061 + $0x1c] sm:$0xf]
    %v1070 = vld [vmem:[%s1061 + $0x20] sm:$0xf]
    %v1071 = vld [vmem:[%s1061 + $0x24] sm:$0xf]
    %v1072 = vld [vmem:[%s1061 + $0x28] sm:$0xf]
    %v1073 = vld [vmem:[%s1061 + $0x2c] sm:$0xf]
    %v1074 = vld [vmem:[%s1061 + $0x30] sm:$0xf]
    %v1075 = vld [vmem:[%s1061 + $0x34] sm:$0xf]
    %v1076 = vld [vmem:[%s1061 + $0x38] sm:$0xf]
    %v1077 = vld [vmem:[%s1061 + $0x3c] sm:$0xf]
    %v1094 = vunpack.c.l.b16 %v1062
    %v1095 = vunpack.c.l.b16 %v1063
    %v1096 = vunpack.c.l.b16 %v1064
    %v1097 = vunpack.c.l.b16 %v1065
    %v1098 = vunpack.c.l.b16 %v1066
    %v1099 = vunpack.c.l.b16 %v1067
    %v1100 = vunpack.c.l.b16 %v1068
    %v1101 = vunpack.c.l.b16 %v1069
    %v1102 = vunpack.c.l.b16 %v1070
    %v1103 = vunpack.c.l.b16 %v1071
    %v1104 = vunpack.c.l.b16 %v1072
    %v1105 = vunpack.c.l.b16 %v1073
    %v1106 = vunpack.c.l.b16 %v1074
    %v1107 = vunpack.c.l.b16 %v1075
    %v1108 = vunpack.c.l.b16 %v1076
    %v1109 = vunpack.c.l.b16 %v1077
    %v1110 = vpack.c.b16 %v1095, %v1094
    %v1111 = vpack.c.b16 %v1097, %v1096
    %v1112 = vpack.c.b16 %v1099, %v1098
    %v1113 = vpack.c.b16 %v1101, %v1100
    %v1114 = vpack.c.b16 %v1103, %v1102
    %v1115 = vpack.c.b16 %v1105, %v1104
    %v1116 = vpack.c.b16 %v1107, %v1106
    %v1117 = vpack.c.b16 %v1109, %v1108
    %1126 = vmatpush.bf16.msra.mxu0 %v1117
    %1127 = vmatpush.bf16.msra.mxu0 %v1116
    %1128 = vmatpush.bf16.msra.mxu0 %v1115
    %1129 = vmatpush.bf16.msra.mxu0 %v1114
    %1130 = vmatpush.bf16.msra.mxu0 %v1113
    %1131 = vmatpush.bf16.msra.mxu0 %v1112
    %1132 = vmatpush.bf16.msra.mxu0 %v1111
    %1133 = vmatpush.bf16.msra.mxu0 %v1110
    %1134 = vmatmul.bf16.gmra.mxu0 %v1053
    %v1135 = vpop.f32.mrf.mxu0
    %v1136 = vadd.f32 0.0, %v1135
    %v1137 = vpop.f32.mrf.mxu0
    %v1138 = vadd.f32 0.0, %v1137
    %1139 = vmatmul.bf16.gmra.mxu0 %v1054
    %v1140 = vpop.f32.mrf.mxu0
    %v1141 = vadd.f32 0.0, %v1140
    %v1142 = vpop.f32.mrf.mxu0
    %v1143 = vadd.f32 0.0, %v1142
    %1144 = vmatmul.bf16.gmra.mxu0 %v1055
    %v1145 = vpop.f32.mrf.mxu0
    %v1146 = vadd.f32 0.0, %v1145
    %v1147 = vpop.f32.mrf.mxu0
    %v1148 = vadd.f32 0.0, %v1147
    %1149 = vmatmul.bf16.gmra.mxu0 %v1056
    %v1150 = vpop.f32.mrf.mxu0
    %v1151 = vadd.f32 0.0, %v1150
    %v1152 = vpop.f32.mrf.mxu0
    %v1153 = vadd.f32 0.0, %v1152
    %1154 = vmatmul.bf16.gmra.mxu0 %v1057
    %v1155 = vpop.f32.mrf.mxu0
    %v1156 = vadd.f32 0.0, %v1155
    %v1157 = vpop.f32.mrf.mxu0
    %v1158 = vadd.f32 0.0, %v1157
    %1159 = vmatmul.bf16.gmra.mxu0 %v1058
    %v1160 = vpop.f32.mrf.mxu0
    %v1161 = vadd.f32 0.0, %v1160
    %v1162 = vpop.f32.mrf.mxu0
    %v1163 = vadd.f32 0.0, %v1162
    %1164 = vmatmul.bf16.gmra.mxu0 %v1059
    %v1165 = vpop.f32.mrf.mxu0
    %v1166 = vadd.f32 0.0, %v1165
    %v1167 = vpop.f32.mrf.mxu0
    %v1168 = vadd.f32 0.0, %v1167
    %1169 = vmatmul.bf16.gmra.mxu0 %v1060
    %v1170 = vpop.f32.mrf.mxu0
    %v1171 = vadd.f32 0.0, %v1170
    %v1172 = vpop.f32.mrf.mxu0
    %v1173 = vadd.f32 0.0, %v1172
    %1174 = vdwg.mxu0
    %s1175 = scalar_lea.vmem %s8, 1
    %v1176 = vld [vmem:[%s1175] sm:$0x1]
    %v1178 = vperm.slane %v1176, 0
    %v1180 = vmul.f32 %v1136, %v1178
    %v1181 = vmul.f32 %v1138, %v1178
    %v1182 = vmul.f32 %v1141, %v1178
    %v1183 = vmul.f32 %v1143, %v1178
    %v1184 = vmul.f32 %v1146, %v1178
    %v1185 = vmul.f32 %v1148, %v1178
    %v1186 = vmul.f32 %v1151, %v1178
    %v1187 = vmul.f32 %v1153, %v1178
    %v1188 = vmul.f32 %v1156, %v1178
    %v1189 = vmul.f32 %v1158, %v1178
    %v1190 = vmul.f32 %v1161, %v1178
    %v1191 = vmul.f32 %v1163, %v1178
    %v1192 = vmul.f32 %v1166, %v1178
    %v1193 = vmul.f32 %v1168, %v1178
    %v1194 = vmul.f32 %v1171, %v1178
    %v1195 = vmul.f32 %v1173, %v1178
    %s1196 = scalar_lea.vmem %s9, 1
    %v1197 = vld [vmem:[%s1196] sm:$0x1]
    %v1199 = vperm.slane %v1197, 0
    %v1201 = vadd.f32 %v1180, %v1199
    %v1202 = vadd.f32 %v1181, %v1199
    %v1203 = vadd.f32 %v1182, %v1199
    %v1204 = vadd.f32 %v1183, %v1199
    %v1205 = vadd.f32 %v1184, %v1199
    %v1206 = vadd.f32 %v1185, %v1199
    %v1207 = vadd.f32 %v1186, %v1199
    %v1208 = vadd.f32 %v1187, %v1199
    %v1209 = vadd.f32 %v1188, %v1199
    %v1210 = vadd.f32 %v1189, %v1199
    %v1211 = vadd.f32 %v1190, %v1199
    %v1212 = vadd.f32 %v1191, %v1199
    %v1213 = vadd.f32 %v1192, %v1199
    %v1214 = vadd.f32 %v1193, %v1199
    %v1215 = vadd.f32 %v1194, %v1199
    %v1216 = vadd.f32 %v1195, %v1199
    %v1217 = vmax.f32 %v1201, 0.0
    %v1218 = vmax.f32 %v1202, 0.0
    %v1219 = vmax.f32 %v1203, 0.0
    %v1220 = vmax.f32 %v1204, 0.0
    %v1221 = vmax.f32 %v1205, 0.0
    %v1222 = vmax.f32 %v1206, 0.0
    %v1223 = vmax.f32 %v1207, 0.0
    %v1224 = vmax.f32 %v1208, 0.0
    %v1225 = vmax.f32 %v1209, 0.0
    %v1226 = vmax.f32 %v1210, 0.0
    %v1227 = vmax.f32 %v1211, 0.0
    %v1228 = vmax.f32 %v1212, 0.0
    %v1229 = vmax.f32 %v1213, 0.0
    %v1230 = vmax.f32 %v1214, 0.0
    %v1231 = vmax.f32 %v1215, 0.0
    %v1232 = vmax.f32 %v1216, 0.0
    %v1233 = vpack.c.bf16 %v1218, %v1217
    %v1234 = vpack.c.bf16 %v1220, %v1219
    %v1235 = vpack.c.bf16 %v1222, %v1221
    %v1236 = vpack.c.bf16 %v1224, %v1223
    %v1237 = vpack.c.bf16 %v1226, %v1225
    %v1238 = vpack.c.bf16 %v1228, %v1227
    %v1239 = vpack.c.bf16 %v1230, %v1229
    %v1240 = vpack.c.bf16 %v1232, %v1231
    %1241 = vmatpush.bf16.msra.mxu0 %v1240
    %1242 = vmatpush.bf16.msra.mxu0 %v1239
    %1243 = vmatpush.bf16.msra.mxu0 %v1238
    %1244 = vmatpush.bf16.msra.mxu0 %v1237
    %1245 = vmatpush.bf16.msra.mxu0 %v1236
    %1246 = vmatpush.bf16.msra.mxu0 %v1235
    %1247 = vmatpush.bf16.msra.mxu0 %v1234
    %1248 = vmatpush.bf16.msra.mxu0 %v1233
    %1249 = vmatmul.bf16.gmra.mxu0 %v742
    %v1250 = vpop.f32.mrf.mxu0
    %v1251 = vadd.f32 0.0, %v1250
    %v1252 = vpop.f32.mrf.mxu0
    %v1253 = vadd.f32 0.0, %v1252
    %1254 = vmatmul.bf16.gmra.mxu0 %v743
    %v1255 = vpop.f32.mrf.mxu0
    %v1256 = vadd.f32 0.0, %v1255
    %v1257 = vpop.f32.mrf.mxu0
    %v1258 = vadd.f32 0.0, %v1257
    %1259 = vmatmul.bf16.gmra.mxu0 %v744
    %v1260 = vpop.f32.mrf.mxu0
    %v1261 = vadd.f32 0.0, %v1260
    %v1262 = vpop.f32.mrf.mxu0
    %v1263 = vadd.f32 0.0, %v1262
    %1264 = vmatmul.bf16.gmra.mxu0 %v745
    %v1265 = vpop.f32.mrf.mxu0
    %v1266 = vadd.f32 0.0, %v1265
    %v1267 = vpop.f32.mrf.mxu0
    %v1268 = vadd.f32 0.0, %v1267
    %1269 = vmatmul.bf16.gmra.mxu0 %v746
    %v1270 = vpop.f32.mrf.mxu0
    %v1271 = vadd.f32 0.0, %v1270
    %v1272 = vpop.f32.mrf.mxu0
    %v1273 = vadd.f32 0.0, %v1272
    %1274 = vmatmul.bf16.gmra.mxu0 %v747
    %v1275 = vpop.f32.mrf.mxu0
    %v1276 = vadd.f32 0.0, %v1275
    %v1277 = vpop.f32.mrf.mxu0
    %v1278 = vadd.f32 0.0, %v1277
    %1279 = vmatmul.bf16.gmra.mxu0 %v748
    %v1280 = vpop.f32.mrf.mxu0
    %v1281 = vadd.f32 0.0, %v1280
    %v1282 = vpop.f32.mrf.mxu0
    %v1283 = vadd.f32 0.0, %v1282
    %1284 = vmatmul.bf16.gmra.mxu0 %v749
    %v1285 = vpop.f32.mrf.mxu0
    %v1286 = vadd.f32 0.0, %v1285
    %v1287 = vpop.f32.mrf.mxu0
    %v1288 = vadd.f32 0.0, %v1287
    %1289 = vdwg.mxu0
    %s1290 = sld [smem:[#allocation5 + $0x2]]
    %v1291 = vstv %s1290
    %v1292 = vmul.f32 %v1291, %v1217
    %v1293 = vmul.f32 %v1291, %v1218
    %v1294 = vmul.f32 %v1291, %v1219
    %v1295 = vmul.f32 %v1291, %v1220
    %v1296 = vmul.f32 %v1291, %v1221
    %v1297 = vmul.f32 %v1291, %v1222
    %v1298 = vmul.f32 %v1291, %v1223
    %v1299 = vmul.f32 %v1291, %v1224
    %v1300 = vmul.f32 %v1291, %v1225
    %v1301 = vmul.f32 %v1291, %v1226
    %v1302 = vmul.f32 %v1291, %v1227
    %v1303 = vmul.f32 %v1291, %v1228
    %v1304 = vmul.f32 %v1291, %v1229
    %v1305 = vmul.f32 %v1291, %v1230
    %v1306 = vmul.f32 %v1291, %v1231
    %v1307 = vmul.f32 %v1291, %v1232
    %v1308 = vadd.f32 %v1292, %v1251
    %v1309 = vadd.f32 %v1293, %v1253
    %v1310 = vadd.f32 %v1294, %v1256
    %v1311 = vadd.f32 %v1295, %v1258
    %v1312 = vadd.f32 %v1296, %v1261
    %v1313 = vadd.f32 %v1297, %v1263
    %v1314 = vadd.f32 %v1298, %v1266
    %v1315 = vadd.f32 %v1299, %v1268
    %v1316 = vadd.f32 %v1300, %v1271
    %v1317 = vadd.f32 %v1301, %v1273
    %v1318 = vadd.f32 %v1302, %v1276
    %v1319 = vadd.f32 %v1303, %v1278
    %v1320 = vadd.f32 %v1304, %v1281
    %v1321 = vadd.f32 %v1305, %v1283
    %v1322 = vadd.f32 %v1306, %v1286
    %v1323 = vadd.f32 %v1307, %v1288
    %v1324 = vpack.c.bf16 %v1309, %v1308
    %v1325 = vpack.c.bf16 %v1311, %v1310
    %v1326 = vpack.c.bf16 %v1313, %v1312
    %v1327 = vpack.c.bf16 %v1315, %v1314
    %v1328 = vpack.c.bf16 %v1317, %v1316
    %v1329 = vpack.c.bf16 %v1319, %v1318
    %v1330 = vpack.c.bf16 %v1321, %v1320
    %v1331 = vpack.c.bf16 %v1323, %v1322
    %s1332 = scalar_lea.vmem %s4, 128
    %v1333 = vld [vmem:[%s1332] sm:$0xf]
    %v1334 = vld [vmem:[%s1332 + $0x4] sm:$0xf]
    %v1335 = vld [vmem:[%s1332 + $0x8] sm:$0xf]
    %v1336 = vld [vmem:[%s1332 + $0xc] sm:$0xf]
    %v1337 = vld [vmem:[%s1332 + $0x10] sm:$0xf]
    %v1338 = vld [vmem:[%s1332 + $0x14] sm:$0xf]
    %v1339 = vld [vmem:[%s1332 + $0x18] sm:$0xf]
    %v1340 = vld [vmem:[%s1332 + $0x1c] sm:$0xf]
    %v1341 = vld [vmem:[%s1332 + $0x20] sm:$0xf]
    %v1342 = vld [vmem:[%s1332 + $0x24] sm:$0xf]
    %v1343 = vld [vmem:[%s1332 + $0x28] sm:$0xf]
    %v1344 = vld [vmem:[%s1332 + $0x2c] sm:$0xf]
    %v1345 = vld [vmem:[%s1332 + $0x30] sm:$0xf]
    %v1346 = vld [vmem:[%s1332 + $0x34] sm:$0xf]
    %v1347 = vld [vmem:[%s1332 + $0x38] sm:$0xf]
    %v1348 = vld [vmem:[%s1332 + $0x3c] sm:$0xf]
    %v1365 = vunpack.c.l.b16 %v1333
    %v1366 = vunpack.c.l.b16 %v1334
    %v1367 = vunpack.c.l.b16 %v1335
    %v1368 = vunpack.c.l.b16 %v1336
    %v1369 = vunpack.c.l.b16 %v1337
    %v1370 = vunpack.c.l.b16 %v1338
    %v1371 = vunpack.c.l.b16 %v1339
    %v1372 = vunpack.c.l.b16 %v1340
    %v1373 = vunpack.c.l.b16 %v1341
    %v1374 = vunpack.c.l.b16 %v1342
    %v1375 = vunpack.c.l.b16 %v1343
    %v1376 = vunpack.c.l.b16 %v1344
    %v1377 = vunpack.c.l.b16 %v1345
    %v1378 = vunpack.c.l.b16 %v1346
    %v1379 = vunpack.c.l.b16 %v1347
    %v1380 = vunpack.c.l.b16 %v1348
    %v1381 = vpack.c.b16 %v1366, %v1365
    %v1382 = vpack.c.b16 %v1368, %v1367
    %v1383 = vpack.c.b16 %v1370, %v1369
    %v1384 = vpack.c.b16 %v1372, %v1371
    %v1385 = vpack.c.b16 %v1374, %v1373
    %v1386 = vpack.c.b16 %v1376, %v1375
    %v1387 = vpack.c.b16 %v1378, %v1377
    %v1388 = vpack.c.b16 %v1380, %v1379
    %1397 = vmatpush.bf16.msra.mxu0 %v1388
    %1398 = vmatpush.bf16.msra.mxu0 %v1387
    %1399 = vmatpush.bf16.msra.mxu0 %v1386
    %1400 = vmatpush.bf16.msra.mxu0 %v1385
    %1401 = vmatpush.bf16.msra.mxu0 %v1384
    %1402 = vmatpush.bf16.msra.mxu0 %v1383
    %1403 = vmatpush.bf16.msra.mxu0 %v1382
    %1404 = vmatpush.bf16.msra.mxu0 %v1381
    %1405 = vmatmul.bf16.gmra.mxu0 %v1324
    %v1406 = vpop.f32.mrf.mxu0
    %v1407 = vadd.f32 0.0, %v1406
    %v1408 = vpop.f32.mrf.mxu0
    %v1409 = vadd.f32 0.0, %v1408
    %1410 = vmatmul.bf16.gmra.mxu0 %v1325
    %v1411 = vpop.f32.mrf.mxu0
    %v1412 = vadd.f32 0.0, %v1411
    %v1413 = vpop.f32.mrf.mxu0
    %v1414 = vadd.f32 0.0, %v1413
    %1415 = vmatmul.bf16.gmra.mxu0 %v1326
    %v1416 = vpop.f32.mrf.mxu0
    %v1417 = vadd.f32 0.0, %v1416
    %v1418 = vpop.f32.mrf.mxu0
    %v1419 = vadd.f32 0.0, %v1418
    %1420 = vmatmul.bf16.gmra.mxu0 %v1327
    %v1421 = vpop.f32.mrf.mxu0
    %v1422 = vadd.f32 0.0, %v1421
    %v1423 = vpop.f32.mrf.mxu0
    %v1424 = vadd.f32 0.0, %v1423
    %1425 = vmatmul.bf16.gmra.mxu0 %v1328
    %v1426 = vpop.f32.mrf.mxu0
    %v1427 = vadd.f32 0.0, %v1426
    %v1428 = vpop.f32.mrf.mxu0
    %v1429 = vadd.f32 0.0, %v1428
    %1430 = vmatmul.bf16.gmra.mxu0 %v1329
    %v1431 = vpop.f32.mrf.mxu0
    %v1432 = vadd.f32 0.0, %v1431
    %v1433 = vpop.f32.mrf.mxu0
    %v1434 = vadd.f32 0.0, %v1433
    %1435 = vmatmul.bf16.gmra.mxu0 %v1330
    %v1436 = vpop.f32.mrf.mxu0
    %v1437 = vadd.f32 0.0, %v1436
    %v1438 = vpop.f32.mrf.mxu0
    %v1439 = vadd.f32 0.0, %v1438
    %1440 = vmatmul.bf16.gmra.mxu0 %v1331
    %v1441 = vpop.f32.mrf.mxu0
    %v1442 = vadd.f32 0.0, %v1441
    %v1443 = vpop.f32.mrf.mxu0
    %v1444 = vadd.f32 0.0, %v1443
    %1445 = vdwg.mxu0
    %s1446 = scalar_lea.vmem %s5, 2
    %v1447 = vld [vmem:[%s1446] sm:$0x1]
    %v1449 = vperm.slane %v1447, 0
    %v1451 = vmul.f32 %v1407, %v1449
    %v1452 = vmul.f32 %v1409, %v1449
    %v1453 = vmul.f32 %v1412, %v1449
    %v1454 = vmul.f32 %v1414, %v1449
    %v1455 = vmul.f32 %v1417, %v1449
    %v1456 = vmul.f32 %v1419, %v1449
    %v1457 = vmul.f32 %v1422, %v1449
    %v1458 = vmul.f32 %v1424, %v1449
    %v1459 = vmul.f32 %v1427, %v1449
    %v1460 = vmul.f32 %v1429, %v1449
    %v1461 = vmul.f32 %v1432, %v1449
    %v1462 = vmul.f32 %v1434, %v1449
    %v1463 = vmul.f32 %v1437, %v1449
    %v1464 = vmul.f32 %v1439, %v1449
    %v1465 = vmul.f32 %v1442, %v1449
    %v1466 = vmul.f32 %v1444, %v1449
    %s1467 = scalar_lea.vmem %s6, 2
    %v1468 = vld [vmem:[%s1467] sm:$0x1]
    %v1470 = vperm.slane %v1468, 0
    %v1472 = vadd.f32 %v1451, %v1470
    %v1473 = vadd.f32 %v1452, %v1470
    %v1474 = vadd.f32 %v1453, %v1470
    %v1475 = vadd.f32 %v1454, %v1470
    %v1476 = vadd.f32 %v1455, %v1470
    %v1477 = vadd.f32 %v1456, %v1470
    %v1478 = vadd.f32 %v1457, %v1470
    %v1479 = vadd.f32 %v1458, %v1470
    %v1480 = vadd.f32 %v1459, %v1470
    %v1481 = vadd.f32 %v1460, %v1470
    %v1482 = vadd.f32 %v1461, %v1470
    %v1483 = vadd.f32 %v1462, %v1470
    %v1484 = vadd.f32 %v1463, %v1470
    %v1485 = vadd.f32 %v1464, %v1470
    %v1486 = vadd.f32 %v1465, %v1470
    %v1487 = vadd.f32 %v1466, %v1470
    %vm1488 = vcmp.gt.f32.partialorder %v1472, 0.0
    %vm1489 = vcmp.gt.f32.partialorder %v1473, 0.0
    %vm1490 = vcmp.gt.f32.partialorder %v1474, 0.0
    %vm1491 = vcmp.gt.f32.partialorder %v1475, 0.0
    %vm1492 = vcmp.gt.f32.partialorder %v1476, 0.0
    %vm1493 = vcmp.gt.f32.partialorder %v1477, 0.0
    %vm1494 = vcmp.gt.f32.partialorder %v1478, 0.0
    %vm1495 = vcmp.gt.f32.partialorder %v1479, 0.0
    %vm1496 = vcmp.gt.f32.partialorder %v1480, 0.0
    %vm1497 = vcmp.gt.f32.partialorder %v1481, 0.0
    %vm1498 = vcmp.gt.f32.partialorder %v1482, 0.0
    %vm1499 = vcmp.gt.f32.partialorder %v1483, 0.0
    %vm1500 = vcmp.gt.f32.partialorder %v1484, 0.0
    %vm1501 = vcmp.gt.f32.partialorder %v1485, 0.0
    %vm1502 = vcmp.gt.f32.partialorder %v1486, 0.0
    %vm1503 = vcmp.gt.f32.partialorder %v1487, 0.0
    %v1504 = vmul.f32 %v1472, 0.01
    %v1505 = vmul.f32 %v1473, 0.01
    %v1506 = vmul.f32 %v1474, 0.01
    %v1507 = vmul.f32 %v1475, 0.01
    %v1508 = vmul.f32 %v1476, 0.01
    %v1509 = vmul.f32 %v1477, 0.01
    %v1510 = vmul.f32 %v1478, 0.01
    %v1511 = vmul.f32 %v1479, 0.01
    %v1512 = vmul.f32 %v1480, 0.01
    %v1513 = vmul.f32 %v1481, 0.01
    %v1514 = vmul.f32 %v1482, 0.01
    %v1515 = vmul.f32 %v1483, 0.01
    %v1516 = vmul.f32 %v1484, 0.01
    %v1517 = vmul.f32 %v1485, 0.01
    %v1518 = vmul.f32 %v1486, 0.01
    %v1519 = vmul.f32 %v1487, 0.01
    %v1520 = vsel %vm1488, %v1472, %v1504
    %v1521 = vsel %vm1489, %v1473, %v1505
    %v1522 = vsel %vm1490, %v1474, %v1506
    %v1523 = vsel %vm1491, %v1475, %v1507
    %v1524 = vsel %vm1492, %v1476, %v1508
    %v1525 = vsel %vm1493, %v1477, %v1509
    %v1526 = vsel %vm1494, %v1478, %v1510
    %v1527 = vsel %vm1495, %v1479, %v1511
    %v1528 = vsel %vm1496, %v1480, %v1512
    %v1529 = vsel %vm1497, %v1481, %v1513
    %v1530 = vsel %vm1498, %v1482, %v1514
    %v1531 = vsel %vm1499, %v1483, %v1515
    %v1532 = vsel %vm1500, %v1484, %v1516
    %v1533 = vsel %vm1501, %v1485, %v1517
    %v1534 = vsel %vm1502, %v1486, %v1518
    %v1535 = vsel %vm1503, %v1487, %v1519
    %v1536 = vpack.c.bf16 %v1521, %v1520
    %v1537 = vpack.c.bf16 %v1523, %v1522
    %v1538 = vpack.c.bf16 %v1525, %v1524
    %v1539 = vpack.c.bf16 %v1527, %v1526
    %v1540 = vpack.c.bf16 %v1529, %v1528
    %v1541 = vpack.c.bf16 %v1531, %v1530
    %v1542 = vpack.c.bf16 %v1533, %v1532
    %v1543 = vpack.c.bf16 %v1535, %v1534
    %s1544 = scalar_lea.vmem %s7, 128
    %v1545 = vld [vmem:[%s1544] sm:$0xf]
    %v1546 = vld [vmem:[%s1544 + $0x4] sm:$0xf]
    %v1547 = vld [vmem:[%s1544 + $0x8] sm:$0xf]
    %v1548 = vld [vmem:[%s1544 + $0xc] sm:$0xf]
    %v1549 = vld [vmem:[%s1544 + $0x10] sm:$0xf]
    %v1550 = vld [vmem:[%s1544 + $0x14] sm:$0xf]
    %v1551 = vld [vmem:[%s1544 + $0x18] sm:$0xf]
    %v1552 = vld [vmem:[%s1544 + $0x1c] sm:$0xf]
    %v1553 = vld [vmem:[%s1544 + $0x20] sm:$0xf]
    %v1554 = vld [vmem:[%s1544 + $0x24] sm:$0xf]
    %v1555 = vld [vmem:[%s1544 + $0x28] sm:$0xf]
    %v1556 = vld [vmem:[%s1544 + $0x2c] sm:$0xf]
    %v1557 = vld [vmem:[%s1544 + $0x30] sm:$0xf]
    %v1558 = vld [vmem:[%s1544 + $0x34] sm:$0xf]
    %v1559 = vld [vmem:[%s1544 + $0x38] sm:$0xf]
    %v1560 = vld [vmem:[%s1544 + $0x3c] sm:$0xf]
    %v1577 = vunpack.c.l.b16 %v1545
    %v1578 = vunpack.c.l.b16 %v1546
    %v1579 = vunpack.c.l.b16 %v1547
    %v1580 = vunpack.c.l.b16 %v1548
    %v1581 = vunpack.c.l.b16 %v1549
    %v1582 = vunpack.c.l.b16 %v1550
    %v1583 = vunpack.c.l.b16 %v1551
    %v1584 = vunpack.c.l.b16 %v1552
    %v1585 = vunpack.c.l.b16 %v1553
    %v1586 = vunpack.c.l.b16 %v1554
    %v1587 = vunpack.c.l.b16 %v1555
    %v1588 = vunpack.c.l.b16 %v1556
    %v1589 = vunpack.c.l.b16 %v1557
    %v1590 = vunpack.c.l.b16 %v1558
    %v1591 = vunpack.c.l.b16 %v1559
    %v1592 = vunpack.c.l.b16 %v1560
    %v1593 = vpack.c.b16 %v1578, %v1577
    %v1594 = vpack.c.b16 %v1580, %v1579
    %v1595 = vpack.c.b16 %v1582, %v1581
    %v1596 = vpack.c.b16 %v1584, %v1583
    %v1597 = vpack.c.b16 %v1586, %v1585
    %v1598 = vpack.c.b16 %v1588, %v1587
    %v1599 = vpack.c.b16 %v1590, %v1589
    %v1600 = vpack.c.b16 %v1592, %v1591
    %1609 = vmatpush.bf16.msra.mxu0 %v1600
    %1610 = vmatpush.bf16.msra.mxu0 %v1599
    %1611 = vmatpush.bf16.msra.mxu0 %v1598
    %1612 = vmatpush.bf16.msra.mxu0 %v1597
    %1613 = vmatpush.bf16.msra.mxu0 %v1596
    %1614 = vmatpush.bf16.msra.mxu0 %v1595
    %1615 = vmatpush.bf16.msra.mxu0 %v1594
    %1616 = vmatpush.bf16.msra.mxu0 %v1593
    %1617 = vmatmul.bf16.gmra.mxu0 %v1536
    %v1618 = vpop.f32.mrf.mxu0
    %v1619 = vadd.f32 0.0, %v1618
    %v1620 = vpop.f32.mrf.mxu0
    %v1621 = vadd.f32 0.0, %v1620
    %1622 = vmatmul.bf16.gmra.mxu0 %v1537
    %v1623 = vpop.f32.mrf.mxu0
    %v1624 = vadd.f32 0.0, %v1623
    %v1625 = vpop.f32.mrf.mxu0
    %v1626 = vadd.f32 0.0, %v1625
    %1627 = vmatmul.bf16.gmra.mxu0 %v1538
    %v1628 = vpop.f32.mrf.mxu0
    %v1629 = vadd.f32 0.0, %v1628
    %v1630 = vpop.f32.mrf.mxu0
    %v1631 = vadd.f32 0.0, %v1630
    %1632 = vmatmul.bf16.gmra.mxu0 %v1539
    %v1633 = vpop.f32.mrf.mxu0
    %v1634 = vadd.f32 0.0, %v1633
    %v1635 = vpop.f32.mrf.mxu0
    %v1636 = vadd.f32 0.0, %v1635
    %1637 = vmatmul.bf16.gmra.mxu0 %v1540
    %v1638 = vpop.f32.mrf.mxu0
    %v1639 = vadd.f32 0.0, %v1638
    %v1640 = vpop.f32.mrf.mxu0
    %v1641 = vadd.f32 0.0, %v1640
    %1642 = vmatmul.bf16.gmra.mxu0 %v1541
    %v1643 = vpop.f32.mrf.mxu0
    %v1644 = vadd.f32 0.0, %v1643
    %v1645 = vpop.f32.mrf.mxu0
    %v1646 = vadd.f32 0.0, %v1645
    %1647 = vmatmul.bf16.gmra.mxu0 %v1542
    %v1648 = vpop.f32.mrf.mxu0
    %v1649 = vadd.f32 0.0, %v1648
    %v1650 = vpop.f32.mrf.mxu0
    %v1651 = vadd.f32 0.0, %v1650
    %1652 = vmatmul.bf16.gmra.mxu0 %v1543
    %v1653 = vpop.f32.mrf.mxu0
    %v1654 = vadd.f32 0.0, %v1653
    %v1655 = vpop.f32.mrf.mxu0
    %v1656 = vadd.f32 0.0, %v1655
    %1657 = vdwg.mxu0
    %s1658 = scalar_lea.vmem %s8, 2
    %v1659 = vld [vmem:[%s1658] sm:$0x1]
    %v1661 = vperm.slane %v1659, 0
    %v1663 = vmul.f32 %v1619, %v1661
    %v1664 = vmul.f32 %v1621, %v1661
    %v1665 = vmul.f32 %v1624, %v1661
    %v1666 = vmul.f32 %v1626, %v1661
    %v1667 = vmul.f32 %v1629, %v1661
    %v1668 = vmul.f32 %v1631, %v1661
    %v1669 = vmul.f32 %v1634, %v1661
    %v1670 = vmul.f32 %v1636, %v1661
    %v1671 = vmul.f32 %v1639, %v1661
    %v1672 = vmul.f32 %v1641, %v1661
    %v1673 = vmul.f32 %v1644, %v1661
    %v1674 = vmul.f32 %v1646, %v1661
    %v1675 = vmul.f32 %v1649, %v1661
    %v1676 = vmul.f32 %v1651, %v1661
    %v1677 = vmul.f32 %v1654, %v1661
    %v1678 = vmul.f32 %v1656, %v1661
    %s1679 = scalar_lea.vmem %s9, 2
    %v1680 = vld [vmem:[%s1679] sm:$0x1]
    %v1682 = vperm.slane %v1680, 0
    %v1684 = vadd.f32 %v1663, %v1682
    %v1685 = vadd.f32 %v1664, %v1682
    %v1686 = vadd.f32 %v1665, %v1682
    %v1687 = vadd.f32 %v1666, %v1682
    %v1688 = vadd.f32 %v1667, %v1682
    %v1689 = vadd.f32 %v1668, %v1682
    %v1690 = vadd.f32 %v1669, %v1682
    %v1691 = vadd.f32 %v1670, %v1682
    %v1692 = vadd.f32 %v1671, %v1682
    %v1693 = vadd.f32 %v1672, %v1682
    %v1694 = vadd.f32 %v1673, %v1682
    %v1695 = vadd.f32 %v1674, %v1682
    %v1696 = vadd.f32 %v1675, %v1682
    %v1697 = vadd.f32 %v1676, %v1682
    %v1698 = vadd.f32 %v1677, %v1682
    %v1699 = vadd.f32 %v1678, %v1682
    %v1700 = vmax.f32 %v1684, 0.0
    %v1701 = vmax.f32 %v1685, 0.0
    %v1702 = vmax.f32 %v1686, 0.0
    %v1703 = vmax.f32 %v1687, 0.0
    %v1704 = vmax.f32 %v1688, 0.0
    %v1705 = vmax.f32 %v1689, 0.0
    %v1706 = vmax.f32 %v1690, 0.0
    %v1707 = vmax.f32 %v1691, 0.0
    %v1708 = vmax.f32 %v1692, 0.0
    %v1709 = vmax.f32 %v1693, 0.0
    %v1710 = vmax.f32 %v1694, 0.0
    %v1711 = vmax.f32 %v1695, 0.0
    %v1712 = vmax.f32 %v1696, 0.0
    %v1713 = vmax.f32 %v1697, 0.0
    %v1714 = vmax.f32 %v1698, 0.0
    %v1715 = vmax.f32 %v1699, 0.0
    %v1716 = vld [vmem:[%s2] sm:$0xf]
    %v1717 = vpack.c.bf16 %v1701, %v1700
    %v1718 = vpack.c.bf16 %v1703, %v1702
    %v1719 = vpack.c.bf16 %v1705, %v1704
    %v1720 = vpack.c.bf16 %v1707, %v1706
    %v1721 = vpack.c.bf16 %v1709, %v1708
    %v1722 = vpack.c.bf16 %v1711, %v1710
    %v1723 = vpack.c.bf16 %v1713, %v1712
    %v1724 = vpack.c.bf16 %v1715, %v1714
    %1725 = vmatpush.bf16.msra.mxu0 %v1724
    %1726 = vmatpush.bf16.msra.mxu0 %v1723
    %1727 = vmatpush.bf16.msra.mxu0 %v1722
    %1728 = vmatpush.bf16.msra.mxu0 %v1721
    %1729 = vmatpush.bf16.msra.mxu0 %v1720
    %1730 = vmatpush.bf16.msra.mxu0 %v1719
    %1731 = vmatpush.bf16.msra.mxu0 %v1718
    %1732 = vmatpush.bf16.msra.mxu0 %v1717
    %1733 = vmatmul.bf16.gmra.mxu0 %v1716
    %v1734 = vpop.f32.mrf.mxu0
    %v1735 = vadd.f32 0.0, %v1734
    %v1736 = vpop.f32.mrf.mxu0
    %1737 = vdwg.mxu0
    %v1738 = vpack.c.bf16 %v1735, %v1735
    %v1739 = vld [vmem:[%s10] sm:$0xf]
    %v1740 = vld [vmem:[%s10 + $0x4] sm:$0xf]
    %v1741 = vld [vmem:[%s10 + $0x8] sm:$0xf]
    %v1742 = vld [vmem:[%s10 + $0xc] sm:$0xf]
    %v1743 = vld [vmem:[%s10 + $0x10] sm:$0xf]
    %v1744 = vld [vmem:[%s10 + $0x14] sm:$0xf]
    %v1745 = vld [vmem:[%s10 + $0x18] sm:$0xf]
    %v1746 = vld [vmem:[%s10 + $0x1c] sm:$0xf]
    %v1747 = vld [vmem:[%s10 + $0x20] sm:$0xf]
    %v1748 = vld [vmem:[%s10 + $0x24] sm:$0xf]
    %v1749 = vld [vmem:[%s10 + $0x28] sm:$0xf]
    %v1750 = vld [vmem:[%s10 + $0x2c] sm:$0xf]
    %v1751 = vld [vmem:[%s10 + $0x30] sm:$0xf]
    %v1752 = vld [vmem:[%s10 + $0x34] sm:$0xf]
    %v1753 = vld [vmem:[%s10 + $0x38] sm:$0xf]
    %v1754 = vld [vmem:[%s10 + $0x3c] sm:$0xf]
    %v1771 = vunpack.c.l.b16 %v1739
    %v1772 = vunpack.c.l.b16 %v1740
    %v1773 = vunpack.c.l.b16 %v1741
    %v1774 = vunpack.c.l.b16 %v1742
    %v1775 = vunpack.c.l.b16 %v1743
    %v1776 = vunpack.c.l.b16 %v1744
    %v1777 = vunpack.c.l.b16 %v1745
    %v1778 = vunpack.c.l.b16 %v1746
    %v1779 = vunpack.c.l.b16 %v1747
    %v1780 = vunpack.c.l.b16 %v1748
    %v1781 = vunpack.c.l.b16 %v1749
    %v1782 = vunpack.c.l.b16 %v1750
    %v1783 = vunpack.c.l.b16 %v1751
    %v1784 = vunpack.c.l.b16 %v1752
    %v1785 = vunpack.c.l.b16 %v1753
    %v1786 = vunpack.c.l.b16 %v1754
    %v1787 = vpack.c.b16 %v1772, %v1771
    %v1788 = vpack.c.b16 %v1774, %v1773
    %v1789 = vpack.c.b16 %v1776, %v1775
    %v1790 = vpack.c.b16 %v1778, %v1777
    %v1791 = vpack.c.b16 %v1780, %v1779
    %v1792 = vpack.c.b16 %v1782, %v1781
    %v1793 = vpack.c.b16 %v1784, %v1783
    %v1794 = vpack.c.b16 %v1786, %v1785
    %1803 = vmatpush.bf16.msra.mxu0 %v1794
    %1804 = vmatpush.bf16.msra.mxu0 %v1793
    %1805 = vmatpush.bf16.msra.mxu0 %v1792
    %1806 = vmatpush.bf16.msra.mxu0 %v1791
    %1807 = vmatpush.bf16.msra.mxu0 %v1790
    %1808 = vmatpush.bf16.msra.mxu0 %v1789
    %1809 = vmatpush.bf16.msra.mxu0 %v1788
    %1810 = vmatpush.bf16.msra.mxu0 %v1787
    %1811 = vmatmul.bf16.gmra.mxu0 %v1738
    %v1812 = vpop.f32.mrf.mxu0
    %v1813 = vadd.f32 0.0, %v1812
    %v1814 = vpop.f32.mrf.mxu0
    %1815 = vdwg.mxu0
    %v1816 = vld [vmem:[%s11] sm:$0x1]
    %v1818 = vperm.slane %v1816, 0
    %v1820 = vmul.f32 %v1813, %v1818
    %v1821 = vld [vmem:[%s12] sm:$0x1]
    %v1823 = vperm.slane %v1821, 0
    %v1825 = vadd.f32 %v1820, %v1823
    %v1826 = vmax.f32 %v1825, 0.0
    %v1827 = vpack.c.bf16 %v1826, %v1826
    %v1828 = vld [vmem:[%s13] sm:$0xf]
    %v1829 = vld [vmem:[%s13 + $0x4] sm:$0xf]
    %v1830 = vld [vmem:[%s13 + $0x8] sm:$0xf]
    %v1831 = vld [vmem:[%s13 + $0xc] sm:$0xf]
    %v1832 = vld [vmem:[%s13 + $0x10] sm:$0xf]
    %v1833 = vld [vmem:[%s13 + $0x14] sm:$0xf]
    %v1834 = vld [vmem:[%s13 + $0x18] sm:$0xf]
    %v1835 = vld [vmem:[%s13 + $0x1c] sm:$0xf]
    %v1836 = vld [vmem:[%s13 + $0x20] sm:$0xf]
    %v1837 = vld [vmem:[%s13 + $0x24] sm:$0xf]
    %v1838 = vld [vmem:[%s13 + $0x28] sm:$0xf]
    %v1839 = vld [vmem:[%s13 + $0x2c] sm:$0xf]
    %v1840 = vld [vmem:[%s13 + $0x30] sm:$0xf]
    %v1841 = vld [vmem:[%s13 + $0x34] sm:$0xf]
    %v1842 = vld [vmem:[%s13 + $0x38] sm:$0xf]
    %v1843 = vld [vmem:[%s13 + $0x3c] sm:$0xf]
    %v1844 = vld [vmem:[%s14] sm:$0x1]
    %v1846 = vperm.slane %v1844, 0
    %v1864 = vunpack.c.l.b16 %v1828
    %v1865 = vunpack.c.l.b16 %v1829
    %v1866 = vunpack.c.l.b16 %v1830
    %v1867 = vunpack.c.l.b16 %v1831
    %v1868 = vunpack.c.l.b16 %v1832
    %v1869 = vunpack.c.l.b16 %v1833
    %v1870 = vunpack.c.l.b16 %v1834
    %v1871 = vunpack.c.l.b16 %v1835
    %v1872 = vunpack.c.l.b16 %v1836
    %v1873 = vunpack.c.l.b16 %v1837
    %v1874 = vunpack.c.l.b16 %v1838
    %v1875 = vunpack.c.l.b16 %v1839
    %v1876 = vunpack.c.l.b16 %v1840
    %v1877 = vunpack.c.l.b16 %v1841
    %v1878 = vunpack.c.l.b16 %v1842
    %v1879 = vunpack.c.l.b16 %v1843
    %v1880 = vpack.c.b16 %v1865, %v1864
    %v1881 = vpack.c.b16 %v1867, %v1866
    %v1882 = vpack.c.b16 %v1869, %v1868
    %v1883 = vpack.c.b16 %v1871, %v1870
    %v1884 = vpack.c.b16 %v1873, %v1872
    %v1885 = vpack.c.b16 %v1875, %v1874
    %v1886 = vpack.c.b16 %v1877, %v1876
    %v1887 = vpack.c.b16 %v1879, %v1878
    %1896 = vmatpush.bf16.msra.mxu0 %v1887
    %1897 = vmatpush.bf16.msra.mxu0 %v1886
    %1898 = vmatpush.bf16.msra.mxu0 %v1885
    %1899 = vmatpush.bf16.msra.mxu0 %v1884
    %1900 = vmatpush.bf16.msra.mxu0 %v1883
    %1901 = vmatpush.bf16.msra.mxu0 %v1882
    %1902 = vmatpush.bf16.msra.mxu0 %v1881
    %1903 = vmatpush.bf16.msra.mxu0 %v1880
    %1904 = vmatmul.bf16.gmra.mxu0 %v1827
    %v1905 = vpop.f32.mrf.mxu0
    %v1906 = vadd.f32 %v1846, %v1905
    %v1907 = vpop.f32.mrf.mxu0
    %1908 = vdwg.mxu0
    %1909 = vst [vmem:[%s15] sm:$0xff] %v1906
    // Predicated region
    $region81: #{gin_model_forward.1} parent=1 // pred_check
      _
    $region82: #{gin_model_forward.1} parent=1 // pred_check_branch
      %1911 = sbr.rel (0) target = $region84
    $region83: #{gin_model_forward.1} parent=1 // pred_region
      _
    $region84: #{gin_model_forward.1} parent=1 // pred_fallthru
      _
    // Predicated region
    $region85: #{gin_model_forward.1} parent=1 // pred_check
      _
    $region86: #{gin_model_forward.1} parent=1 // pred_check_branch
      %1913 = sbr.rel (0) target = $region88
    $region87: #{gin_model_forward.1} parent=1 // pred_region
      _
    $region88: #{gin_model_forward.1} parent=1 // pred_fallthru
      _
    %1914 = vsyncpa [#allocation6], 1
  %1915 = vsyncmov [#allocation4]
  %s1916 = vpop.sfrf %1915
  %p1917 = scmp.eq.s32.totalorder %s1916, 0
  %p1918 = pneg %p1917
  %1920 = shalt.err (%p1918)

</llo_original>
